<compile_context>
chip_gen: v7x
topology: tpu7x:2x2x1
jax: 0.10.0
libtpu: 0.0.40
codegen_flags: <defaults>
</compile_context>

<pallas_src>
import functools

import jax
import jax.numpy as jnp
from jax import lax
from jax.experimental import pallas as pl
from jax.experimental.pallas import tpu as pltpu

LEAK = 0.2
BN_EPS = 1e-5


def _leaky(v):
    return jnp.where(v >= 0, v, LEAK * v)


# ---------------------------------------------------------------------------
# In-kernel helpers: circular 3x3 taps built from lane rolls (layout (C, H*W),
# lane index i = y*W + x).
# ---------------------------------------------------------------------------
def _lane_roll(v, shift):
    """Circular roll along the last (lane) axis, jnp.roll semantics, static shift."""
    n = v.shape[-1]
    s = shift % n
    if s == 0:
        return v
    return pltpu.roll(v, s, axis=v.ndim - 1)


def _x_neighbors(v, width):
    """(west, center, east) circular x-neighbours of a (C, H*W) array."""
    xc = lax.broadcasted_iota(jnp.int32, v.shape, v.ndim - 1) % width
    east = jnp.where(xc == width - 1, _lane_roll(v, width - 1), _lane_roll(v, -1))
    west = jnp.where(xc == 0, _lane_roll(v, 1 - width), _lane_roll(v, 1))
    return (west, v, east)                      # indexed by kw = 0, 1, 2  (dx = kw - 1)


def _conv3x3(v, w_packed, cin, width):
    """3x3 circular conv.  v: (cin, H*W)  ->  (cout, H*W).
    w_packed: (cout, 9*cin); column block k = kh*3 + kw holds W_oihw[:, :, kh, kw]."""
    variants = _x_neighbors(v, width)
    acc = None
    for kh in range(3):
        for kw in range(3):
            tap = _lane_roll(variants[kw], (1 - kh) * width)     # dy = kh - 1 shift
            k = kh * 3 + kw
            wk = w_packed[:, k * cin:(k + 1) * cin]              # (cout, cin)
            d = jnp.dot(wk, tap, preferred_element_type=jnp.float32)
            acc = d if acc is None else acc + d
    return acc


# ---------------------------------------------------------------------------
# Fused Pallas kernel: whole res_unit for one image per grid step.
# ---------------------------------------------------------------------------
def _res_unit_kernel(x_ref, s1_ref, t1_ref, wa_ref, ba_ref, wb_ref, bb_ref,
                     w1_ref, b1_ref, out_ref, *, width, cin, cout):
    x = x_ref[0]                                                  # (Cin, H*W) f32

    # Branch B: 1x1 conv on bn1(x); bn1 folded into w1/b1 on the host.
    outb = jnp.dot(w1_ref[...], x, preferred_element_type=jnp.float32) + b1_ref[...]

    # Branch A: bn1 -> LeakyReLU -> conv3a (bn2 pre-folded) -> LeakyReLU -> conv3b
    a = _leaky(x * s1_ref[...] + t1_ref[...])                     # (Cin, H*W)
    h = _conv3x3(a, wa_ref[...], cin, width)                      # == scale2 * conv3a(a)
    z = _leaky(h + ba_ref[...])                                   # bn2 + LeakyReLU
    h2 = _conv3x3(z, wb_ref[...], cout, width)                    # conv3b(z)

    out_ref[0] = h2 + bb_ref[...] + outb                          # lane-dense (Cout, H*W) store


# ---------------------------------------------------------------------------
# Wrapper: NCHW in / NCHW out, host-side parameter folding only (no data blow-up).
# ---------------------------------------------------------------------------
@jax.jit
def res_unit_forward(x_nchw, params):
    n, ci, h, w = x_nchw.shape
    co = params["w1_oihw"].shape[0]
    hw = h * w

    x_flat = x_nchw.reshape(n, ci, hw).astype(jnp.float32)        # free reshape, stays NCHW

    s1 = params["scale1"].astype(jnp.float32)
    t1 = params["shift1"].astype(jnp.float32)
    s2 = params["scale2"].astype(jnp.float32)
    t2 = params["shift2"].astype(jnp.float32)

    # Fold bn2 into conv3a (scale output rows, fold bias):
    wa = jnp.transpose(params["w3a_oihw"] * s2[:, None, None, None],
                       (0, 2, 3, 1)).reshape(co, 9 * ci)          # (Co, 9*Ci), k = kh*3+kw
    ba = (s2 * params["b3a"] + t2)[:, None]                       # (Co, 1)
    wb = jnp.transpose(params["w3b_oihw"], (0, 2, 3, 1)).reshape(co, 9 * co)
    bb = params["b3b"][:, None]
    # Fold bn1 into the 1x1 conv (branch B):
    w1 = params["w1_oihw"][:, :, 0, 0]                            # (Co, Ci)
    w1_eff = w1 * s1[None, :]
    b1_eff = (w1 @ t1 + params["b1"])[:, None]

    s1c, t1c = s1[:, None], t1[:, None]

    kernel = functools.partial(_res_unit_kernel, width=w, cin=ci, cout=co)
    rep = lambda a: pl.BlockSpec(a.shape, lambda i: (0,) * a.ndim)

    out = pl.pallas_call(
        kernel,
        grid=(n,),
        in_specs=[pl.BlockSpec((1, ci, hw), lambda i: (i, 0, 0)),
                  rep(s1c), rep(t1c), rep(wa), rep(ba), rep(wb), rep(bb),
                  rep(w1_eff), rep(b1_eff)],
        out_specs=pl.BlockSpec((1, co, hw), lambda i: (i, 0, 0)),
        out_shape=jax.ShapeDtypeStruct((n, co, hw), jnp.float32),
        compiler_params=pltpu.CompilerParams(dimension_semantics=("parallel",)),
    )(x_flat, s1c, t1c, wa, ba, wb, bb, w1_eff, b1_eff)

    return out.reshape(n, co, h, w)                               # already NCHW


# ---------------------------------------------------------------------------
# Deterministic parameter init (shapes from res_unit.__init__, BN in eval mode)
# ---------------------------------------------------------------------------
def init_params(key, in_ch, out_ch):
    ks = jax.random.split(key, 16)

    def nrm(k, shape, s=0.1):
        return (s * jax.random.normal(k, shape)).astype(jnp.float32)

    g1, be1 = 1.0 + nrm(ks[0], (in_ch,)), nrm(ks[1], (in_ch,))
    m1, v1 = nrm(ks[2], (in_ch,)), 0.5 + jnp.abs(nrm(ks[3], (in_ch,)))
    scale1 = g1 / jnp.sqrt(v1 + BN_EPS)
    shift1 = be1 - m1 * scale1

    g2, be2 = 1.0 + nrm(ks[4], (out_ch,)), nrm(ks[5], (out_ch,))
    m2, v2 = nrm(ks[6], (out_ch,)), 0.5 + jnp.abs(nrm(ks[7], (out_ch,)))
    scale2 = g2 / jnp.sqrt(v2 + BN_EPS)
    shift2 = be2 - m2 * scale2

    return dict(
        scale1=scale1, shift1=shift1, scale2=scale2, shift2=shift2,
        w3a_oihw=nrm(ks[8], (out_ch, in_ch, 3, 3), 0.2), b3a=nrm(ks[9], (out_ch,)),
        w3b_oihw=nrm(ks[10], (out_ch, out_ch, 3, 3), 0.2), b3b=nrm(ks[11], (out_ch,)),
        w1_oihw=nrm(ks[12], (out_ch, in_ch, 1, 1), 0.2), b1=nrm(ks[13], (out_ch,)),
    )


# ---------------------------------------------------------------------------
# Pure-JAX reference (NCHW, lax.conv with wrap padding) for correctness check
# ---------------------------------------------------------------------------
def ref_forward(x_nchw, p):
    def bn(x, s, t):
        return x * s[None, :, None, None] + t[None, :, None, None]

    def conv_circ(x, w, b):
        xp = jnp.pad(x, ((0, 0), (0, 0), (1, 1), (1, 1)), mode="wrap")
        y = jax.lax.conv_general_dilated(xp, w, (1, 1), "VALID",
                                         dimension_numbers=("NCHW", "OIHW", "NCHW"))
        return y + b[None, :, None, None]

    def conv1x1(x, w, b):
        y = jax.lax.conv_general_dilated(x, w, (1, 1), "VALID",
                                         dimension_numbers=("NCHW", "OIHW", "NCHW"))
        return y + b[None, :, None, None]

    y = bn(x_nchw, p["scale1"], p["shift1"])
    a = _leaky(y)
    c = conv_circ(a, p["w3a_oihw"], p["b3a"])
    c = _leaky(bn(c, p["scale2"], p["shift2"]))
    c = conv_circ(c, p["w3b_oihw"], p["b3b"])
    d = conv1x1(y, p["w1_oihw"], p["b1"])
    return c + d


if __name__ == "__main__":
    N, Ci, Co, H, W = 2, 4, 4, 16, 16
    key = jax.random.PRNGKey(0)
    k_x, k_p = jax.random.split(key)
    x = jax.random.normal(k_x, (N, Ci, H, W), dtype=jnp.float32)
    params = init_params(k_p, Ci, Co)

    out = jax.block_until_ready(res_unit_forward(x, params))
    assert out.shape == (N, Co, H, W)

    ref = ref_forward(x, params)
    err = float(jnp.max(jnp.abs(out - ref)))
    if not jnp.allclose(out, ref, rtol=1e-3, atol=1e-3):
        raise AssertionError(f"Pallas kernel output mismatch, max abs err = {err}")

    print("KERNEL_OK")
</pallas_src>

<mosaic_0001>
module attributes {stable_mosaic.version = 11 : i64} {
  func.func @_res_unit_kernel(%arg0: i32, %arg1: memref<1x4x256xf32, #tpu.memory_space<vmem>>, %arg2: memref<4x1xf32, #tpu.memory_space<vmem>>, %arg3: memref<4x1xf32, #tpu.memory_space<vmem>>, %arg4: memref<4x36xf32, #tpu.memory_space<vmem>>, %arg5: memref<4x1xf32, #tpu.memory_space<vmem>>, %arg6: memref<4x36xf32, #tpu.memory_space<vmem>>, %arg7: memref<4x1xf32, #tpu.memory_space<vmem>>, %arg8: memref<4x4xf32, #tpu.memory_space<vmem>>, %arg9: memref<4x1xf32, #tpu.memory_space<vmem>>, %arg10: memref<1x4x256xf32, #tpu.memory_space<vmem>>) attributes {dimension_semantics = [#tpu.dimension_semantics<parallel>], iteration_bounds = array<i64: 2>, scalar_prefetch = 0 : i64, scratch_operands = 0 : i64, tpu.core_type = #tpu.core_type<tc>, window_params = [{transform_indices = @transform_0, window_bounds = array<i64: 1, 4, 256>}, {pipeline_mode = #tpu.pipeline_mode<synchronous>, transform_indices = @transform_1, window_bounds = array<i64: 4, 1>}, {pipeline_mode = #tpu.pipeline_mode<synchronous>, transform_indices = @transform_2, window_bounds = array<i64: 4, 1>}, {pipeline_mode = #tpu.pipeline_mode<synchronous>, transform_indices = @transform_3, window_bounds = array<i64: 4, 36>}, {pipeline_mode = #tpu.pipeline_mode<synchronous>, transform_indices = @transform_4, window_bounds = array<i64: 4, 1>}, {pipeline_mode = #tpu.pipeline_mode<synchronous>, transform_indices = @transform_5, window_bounds = array<i64: 4, 36>}, {pipeline_mode = #tpu.pipeline_mode<synchronous>, transform_indices = @transform_6, window_bounds = array<i64: 4, 1>}, {pipeline_mode = #tpu.pipeline_mode<synchronous>, transform_indices = @transform_7, window_bounds = array<i64: 4, 4>}, {pipeline_mode = #tpu.pipeline_mode<synchronous>, transform_indices = @transform_8, window_bounds = array<i64: 4, 1>}, {transform_indices = @transform_9, window_bounds = array<i64: 1, 4, 256>}]} {
    %c0 = arith.constant 0 : index
    %c0_0 = arith.constant 0 : index
    %c0_1 = arith.constant 0 : index
    %0 = vector.load %arg1[%c0, %c0_0, %c0_1] : memref<1x4x256xf32, #tpu.memory_space<vmem>>, vector<1x4x256xf32>
    %1 = vector.shape_cast %0 : vector<1x4x256xf32> to vector<4x256xf32>
    %c0_2 = arith.constant 0 : index
    %c0_3 = arith.constant 0 : index
    %2 = vector.load %arg8[%c0_2, %c0_3] : memref<4x4xf32, #tpu.memory_space<vmem>>, vector<4x4xf32>
    %cst = arith.constant dense<0.000000e+00> : vector<4x256xf32>
    %3 = tpu.matmul %2, %1, %cst {dimension_numbers = #tpu.dot_dimension_numbers<[1], [0], [0], [1], [0, 0, 1, 1], [], []>} : vector<4x4xf32>, vector<4x256xf32>, vector<4x256xf32> -> vector<4x256xf32>
    %c0_4 = arith.constant 0 : index
    %c0_5 = arith.constant 0 : index
    %4 = vector.load %arg9[%c0_4, %c0_5] : memref<4x1xf32, #tpu.memory_space<vmem>>, vector<4x1xf32>
    %5 = vector.broadcast %4 : vector<4x1xf32> to vector<4x256xf32>
    %6 = arith.addf %3, %5 : vector<4x256xf32>
    %c0_6 = arith.constant 0 : index
    %c0_7 = arith.constant 0 : index
    %7 = vector.load %arg2[%c0_6, %c0_7] : memref<4x1xf32, #tpu.memory_space<vmem>>, vector<4x1xf32>
    %8 = vector.broadcast %7 : vector<4x1xf32> to vector<4x256xf32>
    %9 = arith.mulf %1, %8 : vector<4x256xf32>
    %c0_8 = arith.constant 0 : index
    %c0_9 = arith.constant 0 : index
    %10 = vector.load %arg3[%c0_8, %c0_9] : memref<4x1xf32, #tpu.memory_space<vmem>>, vector<4x1xf32>
    %11 = vector.broadcast %10 : vector<4x1xf32> to vector<4x256xf32>
    %12 = arith.addf %9, %11 : vector<4x256xf32>
    %cst_10 = arith.constant 0.000000e+00 : f32
    %13 = vector.broadcast %cst_10 : f32 to vector<4x256xf32>
    %14 = arith.cmpf oge, %12, %13 : vector<4x256xf32>
    %cst_11 = arith.constant 2.000000e-01 : f32
    %15 = vector.broadcast %cst_11 : f32 to vector<4x256xf32>
    %16 = arith.mulf %15, %12 : vector<4x256xf32>
    %17 = arith.select %14, %12, %16 : vector<4x256xi1>, vector<4x256xf32>
    %c0_12 = arith.constant 0 : index
    %c0_13 = arith.constant 0 : index
    %18 = vector.load %arg4[%c0_12, %c0_13] : memref<4x36xf32, #tpu.memory_space<vmem>>, vector<4x36xf32>
    %19 = tpu.iota {dimensions = array<i32: 1>} : vector<4x256xi32>
    %c16_i32 = arith.constant 16 : i32
    %c0_i32 = arith.constant 0 : i32
    %20 = arith.cmpi eq, %c16_i32, %c0_i32 : i32
    %c1_i32 = arith.constant 1 : i32
    %21 = arith.select %20, %c1_i32, %c16_i32 : i32
    %22 = vector.broadcast %21 : i32 to vector<4x256xi32>
    %23 = arith.remsi %19, %22 : vector<4x256xi32>
    %c0_i32_14 = arith.constant 0 : i32
    %24 = vector.broadcast %c0_i32_14 : i32 to vector<4x256xi32>
    %25 = arith.cmpi ne, %23, %24 : vector<4x256xi32>
    %c0_i32_15 = arith.constant 0 : i32
    %26 = vector.broadcast %c0_i32_15 : i32 to vector<4x256xi32>
    %27 = arith.cmpi slt, %23, %26 : vector<4x256xi32>
    %c0_i32_16 = arith.constant 0 : i32
    %28 = arith.cmpi slt, %21, %c0_i32_16 : i32
    %29 = vector.broadcast %28 : i1 to vector<4x256xi1>
    %30 = vector.broadcast %29 : vector<4x256xi1> to vector<4x256xi1>
    %31 = arith.xori %27, %30 : vector<4x256xi1>
    %32 = arith.andi %31, %25 : vector<4x256xi1>
    %33 = vector.broadcast %21 : i32 to vector<4x256xi32>
    %34 = arith.addi %23, %33 : vector<4x256xi32>
    %35 = arith.select %32, %34, %23 : vector<4x256xi1>, vector<4x256xi32>
    %c15_i32 = arith.constant 15 : i32
    %36 = vector.broadcast %c15_i32 : i32 to vector<4x256xi32>
    %37 = arith.cmpi eq, %35, %36 : vector<4x256xi32>
    %c15_i32_17 = arith.constant 15 : i32
    %38 = tpu.dynamic_rotate %17 by %c15_i32_17 dim 1 : vector<4x256xf32>, i32 -> vector<4x256xf32>
    %c255_i32 = arith.constant 255 : i32
    %39 = tpu.dynamic_rotate %17 by %c255_i32 dim 1 : vector<4x256xf32>, i32 -> vector<4x256xf32>
    %40 = arith.select %37, %38, %39 : vector<4x256xi1>, vector<4x256xf32>
    %c0_i32_18 = arith.constant 0 : i32
    %41 = vector.broadcast %c0_i32_18 : i32 to vector<4x256xi32>
    %42 = arith.cmpi eq, %35, %41 : vector<4x256xi32>
    %c241_i32 = arith.constant 241 : i32
    %43 = tpu.dynamic_rotate %17 by %c241_i32 dim 1 : vector<4x256xf32>, i32 -> vector<4x256xf32>
    %c1_i32_19 = arith.constant 1 : i32
    %44 = tpu.dynamic_rotate %17 by %c1_i32_19 dim 1 : vector<4x256xf32>, i32 -> vector<4x256xf32>
    %45 = arith.select %42, %43, %44 : vector<4x256xi1>, vector<4x256xf32>
    %c16_i32_20 = arith.constant 16 : i32
    %46 = tpu.dynamic_rotate %45 by %c16_i32_20 dim 1 : vector<4x256xf32>, i32 -> vector<4x256xf32>
    %47 = vector.extract_strided_slice %18 {offsets = [0, 0], sizes = [4, 4], strides = [1, 1]} : vector<4x36xf32> to vector<4x4xf32>
    %cst_21 = arith.constant dense<0.000000e+00> : vector<4x256xf32>
    %48 = tpu.matmul %47, %46, %cst_21 {dimension_numbers = #tpu.dot_dimension_numbers<[1], [0], [0], [1], [0, 0, 1, 1], [], []>} : vector<4x4xf32>, vector<4x256xf32>, vector<4x256xf32> -> vector<4x256xf32>
    %c16_i32_22 = arith.constant 16 : i32
    %49 = tpu.dynamic_rotate %17 by %c16_i32_22 dim 1 : vector<4x256xf32>, i32 -> vector<4x256xf32>
    %50 = vector.extract_strided_slice %18 {offsets = [0, 4], sizes = [4, 4], strides = [1, 1]} : vector<4x36xf32> to vector<4x4xf32>
    %cst_23 = arith.constant dense<0.000000e+00> : vector<4x256xf32>
    %51 = tpu.matmul %50, %49, %cst_23 {dimension_numbers = #tpu.dot_dimension_numbers<[1], [0], [0], [1], [0, 0, 1, 1], [], []>} : vector<4x4xf32>, vector<4x256xf32>, vector<4x256xf32> -> vector<4x256xf32>
    %52 = arith.addf %48, %51 : vector<4x256xf32>
    %c16_i32_24 = arith.constant 16 : i32
    %53 = tpu.dynamic_rotate %40 by %c16_i32_24 dim 1 : vector<4x256xf32>, i32 -> vector<4x256xf32>
    %54 = vector.extract_strided_slice %18 {offsets = [0, 8], sizes = [4, 4], strides = [1, 1]} : vector<4x36xf32> to vector<4x4xf32>
    %cst_25 = arith.constant dense<0.000000e+00> : vector<4x256xf32>
    %55 = tpu.matmul %54, %53, %cst_25 {dimension_numbers = #tpu.dot_dimension_numbers<[1], [0], [0], [1], [0, 0, 1, 1], [], []>} : vector<4x4xf32>, vector<4x256xf32>, vector<4x256xf32> -> vector<4x256xf32>
    %56 = arith.addf %52, %55 : vector<4x256xf32>
    %57 = vector.extract_strided_slice %18 {offsets = [0, 12], sizes = [4, 4], strides = [1, 1]} : vector<4x36xf32> to vector<4x4xf32>
    %cst_26 = arith.constant dense<0.000000e+00> : vector<4x256xf32>
    %58 = tpu.matmul %57, %45, %cst_26 {dimension_numbers = #tpu.dot_dimension_numbers<[1], [0], [0], [1], [0, 0, 1, 1], [], []>} : vector<4x4xf32>, vector<4x256xf32>, vector<4x256xf32> -> vector<4x256xf32>
    %59 = arith.addf %56, %58 : vector<4x256xf32>
    %60 = vector.extract_strided_slice %18 {offsets = [0, 16], sizes = [4, 4], strides = [1, 1]} : vector<4x36xf32> to vector<4x4xf32>
    %cst_27 = arith.constant dense<0.000000e+00> : vector<4x256xf32>
    %61 = tpu.matmul %60, %17, %cst_27 {dimension_numbers = #tpu.dot_dimension_numbers<[1], [0], [0], [1], [0, 0, 1, 1], [], []>} : vector<4x4xf32>, vector<4x256xf32>, vector<4x256xf32> -> vector<4x256xf32>
    %62 = arith.addf %59, %61 : vector<4x256xf32>
    %63 = vector.extract_strided_slice %18 {offsets = [0, 20], sizes = [4, 4], strides = [1, 1]} : vector<4x36xf32> to vector<4x4xf32>
    %cst_28 = arith.constant dense<0.000000e+00> : vector<4x256xf32>
    %64 = tpu.matmul %63, %40, %cst_28 {dimension_numbers = #tpu.dot_dimension_numbers<[1], [0], [0], [1], [0, 0, 1, 1], [], []>} : vector<4x4xf32>, vector<4x256xf32>, vector<4x256xf32> -> vector<4x256xf32>
    %65 = arith.addf %62, %64 : vector<4x256xf32>
    %c240_i32 = arith.constant 240 : i32
    %66 = tpu.dynamic_rotate %45 by %c240_i32 dim 1 : vector<4x256xf32>, i32 -> vector<4x256xf32>
    %67 = vector.extract_strided_slice %18 {offsets = [0, 24], sizes = [4, 4], strides = [1, 1]} : vector<4x36xf32> to vector<4x4xf32>
    %cst_29 = arith.constant dense<0.000000e+00> : vector<4x256xf32>
    %68 = tpu.matmul %67, %66, %cst_29 {dimension_numbers = #tpu.dot_dimension_numbers<[1], [0], [0], [1], [0, 0, 1, 1], [], []>} : vector<4x4xf32>, vector<4x256xf32>, vector<4x256xf32> -> vector<4x256xf32>
    %69 = arith.addf %65, %68 : vector<4x256xf32>
    %c240_i32_30 = arith.constant 240 : i32
    %70 = tpu.dynamic_rotate %17 by %c240_i32_30 dim 1 : vector<4x256xf32>, i32 -> vector<4x256xf32>
    %71 = vector.extract_strided_slice %18 {offsets = [0, 28], sizes = [4, 4], strides = [1, 1]} : vector<4x36xf32> to vector<4x4xf32>
    %cst_31 = arith.constant dense<0.000000e+00> : vector<4x256xf32>
    %72 = tpu.matmul %71, %70, %cst_31 {dimension_numbers = #tpu.dot_dimension_numbers<[1], [0], [0], [1], [0, 0, 1, 1], [], []>} : vector<4x4xf32>, vector<4x256xf32>, vector<4x256xf32> -> vector<4x256xf32>
    %73 = arith.addf %69, %72 : vector<4x256xf32>
    %c240_i32_32 = arith.constant 240 : i32
    %74 = tpu.dynamic_rotate %40 by %c240_i32_32 dim 1 : vector<4x256xf32>, i32 -> vector<4x256xf32>
    %75 = vector.extract_strided_slice %18 {offsets = [0, 32], sizes = [4, 4], strides = [1, 1]} : vector<4x36xf32> to vector<4x4xf32>
    %cst_33 = arith.constant dense<0.000000e+00> : vector<4x256xf32>
    %76 = tpu.matmul %75, %74, %cst_33 {dimension_numbers = #tpu.dot_dimension_numbers<[1], [0], [0], [1], [0, 0, 1, 1], [], []>} : vector<4x4xf32>, vector<4x256xf32>, vector<4x256xf32> -> vector<4x256xf32>
    %77 = arith.addf %73, %76 : vector<4x256xf32>
    %c0_34 = arith.constant 0 : index
    %c0_35 = arith.constant 0 : index
    %78 = vector.load %arg5[%c0_34, %c0_35] : memref<4x1xf32, #tpu.memory_space<vmem>>, vector<4x1xf32>
    %79 = vector.broadcast %78 : vector<4x1xf32> to vector<4x256xf32>
    %80 = arith.addf %77, %79 : vector<4x256xf32>
    %cst_36 = arith.constant 0.000000e+00 : f32
    %81 = vector.broadcast %cst_36 : f32 to vector<4x256xf32>
    %82 = arith.cmpf oge, %80, %81 : vector<4x256xf32>
    %cst_37 = arith.constant 2.000000e-01 : f32
    %83 = vector.broadcast %cst_37 : f32 to vector<4x256xf32>
    %84 = arith.mulf %83, %80 : vector<4x256xf32>
    %85 = arith.select %82, %80, %84 : vector<4x256xi1>, vector<4x256xf32>
    %c0_38 = arith.constant 0 : index
    %c0_39 = arith.constant 0 : index
    %86 = vector.load %arg6[%c0_38, %c0_39] : memref<4x36xf32, #tpu.memory_space<vmem>>, vector<4x36xf32>
    %87 = tpu.iota {dimensions = array<i32: 1>} : vector<4x256xi32>
    %c16_i32_40 = arith.constant 16 : i32
    %c0_i32_41 = arith.constant 0 : i32
    %88 = arith.cmpi eq, %c16_i32_40, %c0_i32_41 : i32
    %c1_i32_42 = arith.constant 1 : i32
    %89 = arith.select %88, %c1_i32_42, %c16_i32_40 : i32
    %90 = vector.broadcast %89 : i32 to vector<4x256xi32>
    %91 = arith.remsi %87, %90 : vector<4x256xi32>
    %c0_i32_43 = arith.constant 0 : i32
    %92 = vector.broadcast %c0_i32_43 : i32 to vector<4x256xi32>
    %93 = arith.cmpi ne, %91, %92 : vector<4x256xi32>
    %c0_i32_44 = arith.constant 0 : i32
    %94 = vector.broadcast %c0_i32_44 : i32 to vector<4x256xi32>
    %95 = arith.cmpi slt, %91, %94 : vector<4x256xi32>
    %c0_i32_45 = arith.constant 0 : i32
    %96 = arith.cmpi slt, %89, %c0_i32_45 : i32
    %97 = vector.broadcast %96 : i1 to vector<4x256xi1>
    %98 = vector.broadcast %97 : vector<4x256xi1> to vector<4x256xi1>
    %99 = arith.xori %95, %98 : vector<4x256xi1>
    %100 = arith.andi %99, %93 : vector<4x256xi1>
    %101 = vector.broadcast %89 : i32 to vector<4x256xi32>
    %102 = arith.addi %91, %101 : vector<4x256xi32>
    %103 = arith.select %100, %102, %91 : vector<4x256xi1>, vector<4x256xi32>
    %c15_i32_46 = arith.constant 15 : i32
    %104 = vector.broadcast %c15_i32_46 : i32 to vector<4x256xi32>
    %105 = arith.cmpi eq, %103, %104 : vector<4x256xi32>
    %c15_i32_47 = arith.constant 15 : i32
    %106 = tpu.dynamic_rotate %85 by %c15_i32_47 dim 1 : vector<4x256xf32>, i32 -> vector<4x256xf32>
    %c255_i32_48 = arith.constant 255 : i32
    %107 = tpu.dynamic_rotate %85 by %c255_i32_48 dim 1 : vector<4x256xf32>, i32 -> vector<4x256xf32>
    %108 = arith.select %105, %106, %107 : vector<4x256xi1>, vector<4x256xf32>
    %c0_i32_49 = arith.constant 0 : i32
    %109 = vector.broadcast %c0_i32_49 : i32 to vector<4x256xi32>
    %110 = arith.cmpi eq, %103, %109 : vector<4x256xi32>
    %c241_i32_50 = arith.constant 241 : i32
    %111 = tpu.dynamic_rotate %85 by %c241_i32_50 dim 1 : vector<4x256xf32>, i32 -> vector<4x256xf32>
    %c1_i32_51 = arith.constant 1 : i32
    %112 = tpu.dynamic_rotate %85 by %c1_i32_51 dim 1 : vector<4x256xf32>, i32 -> vector<4x256xf32>
    %113 = arith.select %110, %111, %112 : vector<4x256xi1>, vector<4x256xf32>
    %c16_i32_52 = arith.constant 16 : i32
    %114 = tpu.dynamic_rotate %113 by %c16_i32_52 dim 1 : vector<4x256xf32>, i32 -> vector<4x256xf32>
    %115 = vector.extract_strided_slice %86 {offsets = [0, 0], sizes = [4, 4], strides = [1, 1]} : vector<4x36xf32> to vector<4x4xf32>
    %cst_53 = arith.constant dense<0.000000e+00> : vector<4x256xf32>
    %116 = tpu.matmul %115, %114, %cst_53 {dimension_numbers = #tpu.dot_dimension_numbers<[1], [0], [0], [1], [0, 0, 1, 1], [], []>} : vector<4x4xf32>, vector<4x256xf32>, vector<4x256xf32> -> vector<4x256xf32>
    %c16_i32_54 = arith.constant 16 : i32
    %117 = tpu.dynamic_rotate %85 by %c16_i32_54 dim 1 : vector<4x256xf32>, i32 -> vector<4x256xf32>
    %118 = vector.extract_strided_slice %86 {offsets = [0, 4], sizes = [4, 4], strides = [1, 1]} : vector<4x36xf32> to vector<4x4xf32>
    %cst_55 = arith.constant dense<0.000000e+00> : vector<4x256xf32>
    %119 = tpu.matmul %118, %117, %cst_55 {dimension_numbers = #tpu.dot_dimension_numbers<[1], [0], [0], [1], [0, 0, 1, 1], [], []>} : vector<4x4xf32>, vector<4x256xf32>, vector<4x256xf32> -> vector<4x256xf32>
    %120 = arith.addf %116, %119 : vector<4x256xf32>
    %c16_i32_56 = arith.constant 16 : i32
    %121 = tpu.dynamic_rotate %108 by %c16_i32_56 dim 1 : vector<4x256xf32>, i32 -> vector<4x256xf32>
    %122 = vector.extract_strided_slice %86 {offsets = [0, 8], sizes = [4, 4], strides = [1, 1]} : vector<4x36xf32> to vector<4x4xf32>
    %cst_57 = arith.constant dense<0.000000e+00> : vector<4x256xf32>
    %123 = tpu.matmul %122, %121, %cst_57 {dimension_numbers = #tpu.dot_dimension_numbers<[1], [0], [0], [1], [0, 0, 1, 1], [], []>} : vector<4x4xf32>, vector<4x256xf32>, vector<4x256xf32> -> vector<4x256xf32>
    %124 = arith.addf %120, %123 : vector<4x256xf32>
    %125 = vector.extract_strided_slice %86 {offsets = [0, 12], sizes = [4, 4], strides = [1, 1]} : vector<4x36xf32> to vector<4x4xf32>
    %cst_58 = arith.constant dense<0.000000e+00> : vector<4x256xf32>
    %126 = tpu.matmul %125, %113, %cst_58 {dimension_numbers = #tpu.dot_dimension_numbers<[1], [0], [0], [1], [0, 0, 1, 1], [], []>} : vector<4x4xf32>, vector<4x256xf32>, vector<4x256xf32> -> vector<4x256xf32>
    %127 = arith.addf %124, %126 : vector<4x256xf32>
    %128 = vector.extract_strided_slice %86 {offsets = [0, 16], sizes = [4, 4], strides = [1, 1]} : vector<4x36xf32> to vector<4x4xf32>
    %cst_59 = arith.constant dense<0.000000e+00> : vector<4x256xf32>
    %129 = tpu.matmul %128, %85, %cst_59 {dimension_numbers = #tpu.dot_dimension_numbers<[1], [0], [0], [1], [0, 0, 1, 1], [], []>} : vector<4x4xf32>, vector<4x256xf32>, vector<4x256xf32> -> vector<4x256xf32>
    %130 = arith.addf %127, %129 : vector<4x256xf32>
    %131 = vector.extract_strided_slice %86 {offsets = [0, 20], sizes = [4, 4], strides = [1, 1]} : vector<4x36xf32> to vector<4x4xf32>
    %cst_60 = arith.constant dense<0.000000e+00> : vector<4x256xf32>
    %132 = tpu.matmul %131, %108, %cst_60 {dimension_numbers = #tpu.dot_dimension_numbers<[1], [0], [0], [1], [0, 0, 1, 1], [], []>} : vector<4x4xf32>, vector<4x256xf32>, vector<4x256xf32> -> vector<4x256xf32>
    %133 = arith.addf %130, %132 : vector<4x256xf32>
    %c240_i32_61 = arith.constant 240 : i32
    %134 = tpu.dynamic_rotate %113 by %c240_i32_61 dim 1 : vector<4x256xf32>, i32 -> vector<4x256xf32>
    %135 = vector.extract_strided_slice %86 {offsets = [0, 24], sizes = [4, 4], strides = [1, 1]} : vector<4x36xf32> to vector<4x4xf32>
    %cst_62 = arith.constant dense<0.000000e+00> : vector<4x256xf32>
    %136 = tpu.matmul %135, %134, %cst_62 {dimension_numbers = #tpu.dot_dimension_numbers<[1], [0], [0], [1], [0, 0, 1, 1], [], []>} : vector<4x4xf32>, vector<4x256xf32>, vector<4x256xf32> -> vector<4x256xf32>
    %137 = arith.addf %133, %136 : vector<4x256xf32>
    %c240_i32_63 = arith.constant 240 : i32
    %138 = tpu.dynamic_rotate %85 by %c240_i32_63 dim 1 : vector<4x256xf32>, i32 -> vector<4x256xf32>
    %139 = vector.extract_strided_slice %86 {offsets = [0, 28], sizes = [4, 4], strides = [1, 1]} : vector<4x36xf32> to vector<4x4xf32>
    %cst_64 = arith.constant dense<0.000000e+00> : vector<4x256xf32>
    %140 = tpu.matmul %139, %138, %cst_64 {dimension_numbers = #tpu.dot_dimension_numbers<[1], [0], [0], [1], [0, 0, 1, 1], [], []>} : vector<4x4xf32>, vector<4x256xf32>, vector<4x256xf32> -> vector<4x256xf32>
    %141 = arith.addf %137, %140 : vector<4x256xf32>
    %c240_i32_65 = arith.constant 240 : i32
    %142 = tpu.dynamic_rotate %108 by %c240_i32_65 dim 1 : vector<4x256xf32>, i32 -> vector<4x256xf32>
    %143 = vector.extract_strided_slice %86 {offsets = [0, 32], sizes = [4, 4], strides = [1, 1]} : vector<4x36xf32> to vector<4x4xf32>
    %cst_66 = arith.constant dense<0.000000e+00> : vector<4x256xf32>
    %144 = tpu.matmul %143, %142, %cst_66 {dimension_numbers = #tpu.dot_dimension_numbers<[1], [0], [0], [1], [0, 0, 1, 1], [], []>} : vector<4x4xf32>, vector<4x256xf32>, vector<4x256xf32> -> vector<4x256xf32>
    %145 = arith.addf %141, %144 : vector<4x256xf32>
    %c0_67 = arith.constant 0 : index
    %c0_68 = arith.constant 0 : index
    %146 = vector.load %arg7[%c0_67, %c0_68] : memref<4x1xf32, #tpu.memory_space<vmem>>, vector<4x1xf32>
    %147 = vector.broadcast %146 : vector<4x1xf32> to vector<4x256xf32>
    %148 = arith.addf %145, %147 : vector<4x256xf32>
    %149 = arith.addf %148, %6 : vector<4x256xf32>
    %c0_69 = arith.constant 0 : index
    %c0_70 = arith.constant 0 : index
    %c0_71 = arith.constant 0 : index
    %150 = vector.load %arg10[%c0_69, %c0_70, %c0_71] : memref<1x4x256xf32, #tpu.memory_space<vmem>>, vector<1x4x256xf32>
    %151 = vector.shape_cast %150 : vector<1x4x256xf32> to vector<4x256xf32>
    %152 = vector.shape_cast %149 : vector<4x256xf32> to vector<1x4x256xf32>
    tpu.vector_store %arg10[%c0_69, %c0_70, %c0_71], %152 {strides = array<i32>} : memref<1x4x256xf32, #tpu.memory_space<vmem>>, vector<1x4x256xf32>,
    return
  }
  func.func @transform_0(%arg0: i32) -> (i32, i32, i32) {
    %c0_i32 = arith.constant 0 : i32
    %c0_i32_0 = arith.constant 0 : i32
    %c0_i32_1 = arith.constant 0 : i32
    return %arg0, %c0_i32, %c0_i32_0 : i32, i32, i32
  }
  func.func @transform_1(%arg0: i32) -> (i32, i32) {
    %c0_i32 = arith.constant 0 : i32
    %c0_i32_0 = arith.constant 0 : i32
    %c0_i32_1 = arith.constant 0 : i32
    return %c0_i32, %c0_i32_0 : i32, i32
  }
  func.func @transform_2(%arg0: i32) -> (i32, i32) {
    %c0_i32 = arith.constant 0 : i32
    %c0_i32_0 = arith.constant 0 : i32
    %c0_i32_1 = arith.constant 0 : i32
    return %c0_i32, %c0_i32_0 : i32, i32
  }
  func.func @transform_3(%arg0: i32) -> (i32, i32) {
    %c0_i32 = arith.constant 0 : i32
    %c0_i32_0 = arith.constant 0 : i32
    %c0_i32_1 = arith.constant 0 : i32
    return %c0_i32, %c0_i32_0 : i32, i32
  }
  func.func @transform_4(%arg0: i32) -> (i32, i32) {
    %c0_i32 = arith.constant 0 : i32
    %c0_i32_0 = arith.constant 0 : i32
    %c0_i32_1 = arith.constant 0 : i32
    return %c0_i32, %c0_i32_0 : i32, i32
  }
  func.func @transform_5(%arg0: i32) -> (i32, i32) {
    %c0_i32 = arith.constant 0 : i32
    %c0_i32_0 = arith.constant 0 : i32
    %c0_i32_1 = arith.constant 0 : i32
    return %c0_i32, %c0_i32_0 : i32, i32
  }
  func.func @transform_6(%arg0: i32) -> (i32, i32) {
    %c0_i32 = arith.constant 0 : i32
    %c0_i32_0 = arith.constant 0 : i32
    %c0_i32_1 = arith.constant 0 : i32
    return %c0_i32, %c0_i32_0 : i32, i32
  }
  func.func @transform_7(%arg0: i32) -> (i32, i32) {
    %c0_i32 = arith.constant 0 : i32
    %c0_i32_0 = arith.constant 0 : i32
    %c0_i32_1 = arith.constant 0 : i32
    return %c0_i32, %c0_i32_0 : i32, i32
  }
  func.func @transform_8(%arg0: i32) -> (i32, i32) {
    %c0_i32 = arith.constant 0 : i32
    %c0_i32_0 = arith.constant 0 : i32
    %c0_i32_1 = arith.constant 0 : i32
    return %c0_i32, %c0_i32_0 : i32, i32
  }
  func.func @transform_9(%arg0: i32) -> (i32, i32, i32) {
    %c0_i32 = arith.constant 0 : i32
    %c0_i32_0 = arith.constant 0 : i32
    %c0_i32_1 = arith.constant 0 : i32
    return %arg0, %c0_i32, %c0_i32_0 : i32, i32, i32
  }
}

</mosaic_0001>

<llo_original>
// kernel: res_unit_forward.1
$region0: #{res_unit_forward.1}
  #allocation0 [shape = 'u32[]', space=smem, size = 0x4, offset = 0x4, fixed_abs, tag = 'smem constant byte address 0x4 - core index']
  #allocation1 [shape = 'u32[144,128]{1,0:T(1,128)}', space=vmem, size = 0x12000, scoped, tag = 'internal scratch']
  %s0 = inlined_call_operand.vmem [shape: f32[2,4,256], index: 0, kind: input, shape index: {}]
  %s1 = inlined_call_operand.vmem [shape: f32[4,1], index: 1, kind: input, shape index: {}]
  %s2 = inlined_call_operand.vmem [shape: f32[4,1], index: 2, kind: input, shape index: {}]
  %s3 = inlined_call_operand.vmem [shape: f32[4,36], index: 3, kind: input, shape index: {}]
  %s4 = inlined_call_operand.vmem [shape: f32[4,1], index: 4, kind: input, shape index: {}]
  %s5 = inlined_call_operand.vmem [shape: f32[4,36], index: 5, kind: input, shape index: {}]
  %s6 = inlined_call_operand.vmem [shape: f32[4,1], index: 6, kind: input, shape index: {}]
  %s7 = inlined_call_operand.vmem [shape: f32[4,4], index: 7, kind: input, shape index: {}]
  %s8 = inlined_call_operand.vmem [shape: f32[4,1], index: 8, kind: input, shape index: {}]
  %s9 = inlined_call_operand.vmem [shape: f32[2,4,256], index: 9, kind: output, shape index: {}]
  %s10 = sld [smem:[#allocation0]]
  $region69: #{res_unit_forward.1} parent=0
    _
  %s12 = ssub.s32 1, %s10
  %s13 = scalar_select 0, %s12, %s10
  loop: start=0, step=1, limit=4
  $region2: #{res_unit_forward.1} parent=0 // loop_pre_header
    _
  $region3: #{res_unit_forward.1} parent=0 // loop_header
    %s15 = sphi 0, %s19
    %p16 = scmp.ge.s32.totalorder %s15, 4
    %s25 = sphi 0, %s27
    %s28 = sphi 0, %s25
    %s29 = sphi 0, %s28
    %s45 = sphi 0, %s29
    %s49 = sphi 0, %s49
    %s51 = sphi 0, %s49
    %s52 = sphi 0, %s51
    %s66 = sphi 0, %s52
    %s70 = sphi 0, %s70
    %s72 = sphi 0, %s70
    %s73 = sphi 0, %s72
    %s87 = sphi 0, %s73
    %s91 = sphi 0, %s91
    %s93 = sphi 0, %s91
    %s94 = sphi 0, %s93
    %s108 = sphi 0, %s94
    %s112 = sphi 0, %s112
    %s114 = sphi 0, %s112
    %s115 = sphi 0, %s114
    %s129 = sphi 0, %s115
    %s133 = sphi 0, %s133
    %s135 = sphi 0, %s133
    %s136 = sphi 0, %s135
    %s150 = sphi 0, %s136
    %s154 = sphi 0, %s154
    %s156 = sphi 0, %s154
    %s157 = sphi 0, %s156
    %s171 = sphi 0, %s157
    %s175 = sphi 0, %s175
    %s177 = sphi 0, %s175
    %s178 = sphi 0, %s177
    %s192 = sphi 0, %s178
    %s196 = sphi 0, %s196
    %s198 = sphi 0, %s196
    %s199 = sphi 0, %s198
    %s213 = sphi 0, %s199
    %s219 = sphi 0, %s221
    %s222 = sphi 0, %s219
    %s223 = sphi 0, %s222
    %s239 = sphi 0, %s223
  $region4: #{res_unit_forward.1} parent=0 // loop_header_branch
    %18 = sbr.rel (%p16) target = $region8
  $region5: #{res_unit_forward.1} parent=0 // loop_body
    %s20 = ssub.s32 %s15, 1
    %s21 = ssub.s32 %s15, 2
    %s22 = sadd.s32 %s15, 1
    %s23 = ssub.s32 %s15, %s22
    %p24 = scmp.eq.s32.totalorder %s23, 0
    %s26 = sadd.s32 %s25, 1
    %s27 = scalar_select %p24, %s25, %s26
    %p30 = pneg %p24
    %p31 = scmp.eq.s32.totalorder %s15, 1
    %p32 = por %p30, %p31
    %p33 = scmp.ne.s32.totalorder %s25, %s28
    %p34 = scmp.eq.s32.totalorder %s15, 0
    %p35 = por %p33, %p34
    %p36 = scmp.ne.s32.totalorder %s25, %s28
    %p37 = scmp.eq.s32.totalorder %s20, 1
    %p38 = por %p36, %p37
    %p39 = scmp.ne.s32.totalorder %s28, %s29
    %p40 = scmp.eq.s32.totalorder %s20, 0
    %p41 = por %p39, %p40
    %p42 = scmp.ne.s32.totalorder %s28, %s29
    %p43 = scmp.eq.s32.totalorder %s21, 1
    %p44 = por %p42, %p43
    %p46 = scmp.ne.s32.totalorder %s29, %s45
    %p47 = scmp.eq.s32.totalorder %s21, 0
    %p48 = por %p46, %p47
    %s50 = sadd.s32 %s49, 1
    %p53 = scmp.eq.s32.totalorder %s15, 1
    %p54 = scmp.ne.s32.totalorder %s49, %s51
    %p55 = scmp.eq.s32.totalorder %s15, 0
    %p56 = por %p54, %p55
    %p57 = scmp.ne.s32.totalorder %s49, %s51
    %p58 = scmp.eq.s32.totalorder %s20, 1
    %p59 = por %p57, %p58
    %p60 = scmp.ne.s32.totalorder %s51, %s52
    %p61 = scmp.eq.s32.totalorder %s20, 0
    %p62 = por %p60, %p61
    %p63 = scmp.ne.s32.totalorder %s51, %s52
    %p64 = scmp.eq.s32.totalorder %s21, 1
    %p65 = por %p63, %p64
    %p67 = scmp.ne.s32.totalorder %s52, %s66
    %p68 = scmp.eq.s32.totalorder %s21, 0
    %p69 = por %p67, %p68
    %s71 = sadd.s32 %s70, 1
    %p74 = scmp.eq.s32.totalorder %s15, 1
    %p75 = scmp.ne.s32.totalorder %s70, %s72
    %p76 = scmp.eq.s32.totalorder %s15, 0
    %p77 = por %p75, %p76
    %p78 = scmp.ne.s32.totalorder %s70, %s72
    %p79 = scmp.eq.s32.totalorder %s20, 1
    %p80 = por %p78, %p79
    %p81 = scmp.ne.s32.totalorder %s72, %s73
    %p82 = scmp.eq.s32.totalorder %s20, 0
    %p83 = por %p81, %p82
    %p84 = scmp.ne.s32.totalorder %s72, %s73
    %p85 = scmp.eq.s32.totalorder %s21, 1
    %p86 = por %p84, %p85
    %p88 = scmp.ne.s32.totalorder %s73, %s87
    %p89 = scmp.eq.s32.totalorder %s21, 0
    %p90 = por %p88, %p89
    %s92 = sadd.s32 %s91, 1
    %p95 = scmp.eq.s32.totalorder %s15, 1
    %p96 = scmp.ne.s32.totalorder %s91, %s93
    %p97 = scmp.eq.s32.totalorder %s15, 0
    %p98 = por %p96, %p97
    %p99 = scmp.ne.s32.totalorder %s91, %s93
    %p100 = scmp.eq.s32.totalorder %s20, 1
    %p101 = por %p99, %p100
    %p102 = scmp.ne.s32.totalorder %s93, %s94
    %p103 = scmp.eq.s32.totalorder %s20, 0
    %p104 = por %p102, %p103
    %p105 = scmp.ne.s32.totalorder %s93, %s94
    %p106 = scmp.eq.s32.totalorder %s21, 1
    %p107 = por %p105, %p106
    %p109 = scmp.ne.s32.totalorder %s94, %s108
    %p110 = scmp.eq.s32.totalorder %s21, 0
    %p111 = por %p109, %p110
    %s113 = sadd.s32 %s112, 1
    %p116 = scmp.eq.s32.totalorder %s15, 1
    %p117 = scmp.ne.s32.totalorder %s112, %s114
    %p118 = scmp.eq.s32.totalorder %s15, 0
    %p119 = por %p117, %p118
    %p120 = scmp.ne.s32.totalorder %s112, %s114
    %p121 = scmp.eq.s32.totalorder %s20, 1
    %p122 = por %p120, %p121
    %p123 = scmp.ne.s32.totalorder %s114, %s115
    %p124 = scmp.eq.s32.totalorder %s20, 0
    %p125 = por %p123, %p124
    %p126 = scmp.ne.s32.totalorder %s114, %s115
    %p127 = scmp.eq.s32.totalorder %s21, 1
    %p128 = por %p126, %p127
    %p130 = scmp.ne.s32.totalorder %s115, %s129
    %p131 = scmp.eq.s32.totalorder %s21, 0
    %p132 = por %p130, %p131
    %s134 = sadd.s32 %s133, 1
    %p137 = scmp.eq.s32.totalorder %s15, 1
    %p138 = scmp.ne.s32.totalorder %s133, %s135
    %p139 = scmp.eq.s32.totalorder %s15, 0
    %p140 = por %p138, %p139
    %p141 = scmp.ne.s32.totalorder %s133, %s135
    %p142 = scmp.eq.s32.totalorder %s20, 1
    %p143 = por %p141, %p142
    %p144 = scmp.ne.s32.totalorder %s135, %s136
    %p145 = scmp.eq.s32.totalorder %s20, 0
    %p146 = por %p144, %p145
    %p147 = scmp.ne.s32.totalorder %s135, %s136
    %p148 = scmp.eq.s32.totalorder %s21, 1
    %p149 = por %p147, %p148
    %p151 = scmp.ne.s32.totalorder %s136, %s150
    %p152 = scmp.eq.s32.totalorder %s21, 0
    %p153 = por %p151, %p152
    %s155 = sadd.s32 %s154, 1
    %p158 = scmp.eq.s32.totalorder %s15, 1
    %p159 = scmp.ne.s32.totalorder %s154, %s156
    %p160 = scmp.eq.s32.totalorder %s15, 0
    %p161 = por %p159, %p160
    %p162 = scmp.ne.s32.totalorder %s154, %s156
    %p163 = scmp.eq.s32.totalorder %s20, 1
    %p164 = por %p162, %p163
    %p165 = scmp.ne.s32.totalorder %s156, %s157
    %p166 = scmp.eq.s32.totalorder %s20, 0
    %p167 = por %p165, %p166
    %p168 = scmp.ne.s32.totalorder %s156, %s157
    %p169 = scmp.eq.s32.totalorder %s21, 1
    %p170 = por %p168, %p169
    %p172 = scmp.ne.s32.totalorder %s157, %s171
    %p173 = scmp.eq.s32.totalorder %s21, 0
    %p174 = por %p172, %p173
    %s176 = sadd.s32 %s175, 1
    %p179 = scmp.eq.s32.totalorder %s15, 1
    %p180 = scmp.ne.s32.totalorder %s175, %s177
    %p181 = scmp.eq.s32.totalorder %s15, 0
    %p182 = por %p180, %p181
    %p183 = scmp.ne.s32.totalorder %s175, %s177
    %p184 = scmp.eq.s32.totalorder %s20, 1
    %p185 = por %p183, %p184
    %p186 = scmp.ne.s32.totalorder %s177, %s178
    %p187 = scmp.eq.s32.totalorder %s20, 0
    %p188 = por %p186, %p187
    %p189 = scmp.ne.s32.totalorder %s177, %s178
    %p190 = scmp.eq.s32.totalorder %s21, 1
    %p191 = por %p189, %p190
    %p193 = scmp.ne.s32.totalorder %s178, %s192
    %p194 = scmp.eq.s32.totalorder %s21, 0
    %p195 = por %p193, %p194
    %s197 = sadd.s32 %s196, 1
    %p200 = scmp.eq.s32.totalorder %s15, 1
    %p201 = scmp.ne.s32.totalorder %s196, %s198
    %p202 = scmp.eq.s32.totalorder %s15, 0
    %p203 = por %p201, %p202
    %p204 = scmp.ne.s32.totalorder %s196, %s198
    %p205 = scmp.eq.s32.totalorder %s20, 1
    %p206 = por %p204, %p205
    %p207 = scmp.ne.s32.totalorder %s198, %s199
    %p208 = scmp.eq.s32.totalorder %s20, 0
    %p209 = por %p207, %p208
    %p210 = scmp.ne.s32.totalorder %s198, %s199
    %p211 = scmp.eq.s32.totalorder %s21, 1
    %p212 = por %p210, %p211
    %p214 = scmp.ne.s32.totalorder %s199, %s213
    %p215 = scmp.eq.s32.totalorder %s21, 0
    %p216 = por %p214, %p215
    %s217 = ssub.s32 %s15, %s22
    %p218 = scmp.eq.s32.totalorder %s217, 0
    %s220 = sadd.s32 %s219, 1
    %s221 = scalar_select %p218, %s219, %s220
    %p224 = pneg %p218
    %p225 = scmp.eq.s32.totalorder %s15, 1
    %p226 = por %p224, %p225
    %p227 = scmp.ne.s32.totalorder %s219, %s222
    %p228 = scmp.eq.s32.totalorder %s15, 0
    %p229 = por %p227, %p228
    %p230 = scmp.ne.s32.totalorder %s219, %s222
    %p231 = scmp.eq.s32.totalorder %s20, 1
    %p232 = por %p230, %p231
    %p233 = scmp.ne.s32.totalorder %s222, %s223
    %p234 = scmp.eq.s32.totalorder %s20, 0
    %p235 = por %p233, %p234
    %p236 = scmp.ne.s32.totalorder %s222, %s223
    %p237 = scmp.eq.s32.totalorder %s21, 1
    %p238 = por %p236, %p237
    %p240 = scmp.ne.s32.totalorder %s223, %s239
    %p241 = scmp.eq.s32.totalorder %s21, 0
    %p242 = por %p240, %p241
    %p243 = scmp.le.s32.totalorder 1, %s15
    %p244 = scmp.lt.s32.totalorder %s15, 3
    %p245 = pnand %p243, %p244
    %p246 = pneg %p245
    // Predicated region
    $region9: #{res_unit_forward.1} parent=5 // pred_check
      _
    $region10: #{res_unit_forward.1} parent=5 // pred_check_branch
      %248 = sbr.rel (%p245) target = $region12
    $region11: #{res_unit_forward.1} parent=5 // pred_region
      %s249 = ssub.s32 %s15, 1
      // Predicated region
      $region13: #{res_unit_forward.1} parent=11 // pred_check
        %p250 = pneg %p62
      $region14: #{res_unit_forward.1} parent=11 // pred_check_branch
        %252 = sbr.rel (%p250) target = $region16
      $region15: #{res_unit_forward.1} parent=11 // pred_region
        _
      $region16: #{res_unit_forward.1} parent=11 // pred_fallthru
        _
      // Predicated region
      $region17: #{res_unit_forward.1} parent=11 // pred_check
        %p253 = pneg %p83
      $region18: #{res_unit_forward.1} parent=11 // pred_check_branch
        %255 = sbr.rel (%p253) target = $region20
      $region19: #{res_unit_forward.1} parent=11 // pred_region
        _
      $region20: #{res_unit_forward.1} parent=11 // pred_fallthru
        _
      // Predicated region
      $region21: #{res_unit_forward.1} parent=11 // pred_check
        %p256 = pneg %p104
      $region22: #{res_unit_forward.1} parent=11 // pred_check_branch
        %258 = sbr.rel (%p256) target = $region24
      $region23: #{res_unit_forward.1} parent=11 // pred_region
        _
      $region24: #{res_unit_forward.1} parent=11 // pred_fallthru
        _
      // Predicated region
      $region25: #{res_unit_forward.1} parent=11 // pred_check
        %p259 = pneg %p125
      $region26: #{res_unit_forward.1} parent=11 // pred_check_branch
        %261 = sbr.rel (%p259) target = $region28
      $region27: #{res_unit_forward.1} parent=11 // pred_region
        _
      $region28: #{res_unit_forward.1} parent=11 // pred_fallthru
        _
      // Predicated region
      $region29: #{res_unit_forward.1} parent=11 // pred_check
        %p262 = pneg %p146
      $region30: #{res_unit_forward.1} parent=11 // pred_check_branch
        %264 = sbr.rel (%p262) target = $region32
      $region31: #{res_unit_forward.1} parent=11 // pred_region
        _
      $region32: #{res_unit_forward.1} parent=11 // pred_fallthru
        _
      // Predicated region
      $region33: #{res_unit_forward.1} parent=11 // pred_check
        %p265 = pneg %p167
      $region34: #{res_unit_forward.1} parent=11 // pred_check_branch
        %267 = sbr.rel (%p265) target = $region36
      $region35: #{res_unit_forward.1} parent=11 // pred_region
        _
      $region36: #{res_unit_forward.1} parent=11 // pred_fallthru
        _
      // Predicated region
      $region37: #{res_unit_forward.1} parent=11 // pred_check
        %p268 = pneg %p188
      $region38: #{res_unit_forward.1} parent=11 // pred_check_branch
        %270 = sbr.rel (%p268) target = $region40
      $region39: #{res_unit_forward.1} parent=11 // pred_region
        _
      $region40: #{res_unit_forward.1} parent=11 // pred_fallthru
        _
      // Predicated region
      $region41: #{res_unit_forward.1} parent=11 // pred_check
        %p271 = pneg %p209
      $region42: #{res_unit_forward.1} parent=11 // pred_check_branch
        %273 = sbr.rel (%p271) target = $region44
      $region43: #{res_unit_forward.1} parent=11 // pred_region
        _
      $region44: #{res_unit_forward.1} parent=11 // pred_fallthru
        _
    $region12: #{res_unit_forward.1} parent=5 // pred_fallthru
      _
    %p274 = scmp.lt.s32.totalorder %s15, 2
    // Predicated region
    $region45: #{res_unit_forward.1} parent=5 // pred_check
      %p275 = pneg %p274
    $region46: #{res_unit_forward.1} parent=5 // pred_check_branch
      %277 = sbr.rel (%p275) target = $region48
    $region47: #{res_unit_forward.1} parent=5 // pred_region
      // Predicated region
      $region49: #{res_unit_forward.1} parent=47 // pred_check
        %p278 = pneg %p35
      $region50: #{res_unit_forward.1} parent=47 // pred_check_branch
        %280 = sbr.rel (%p278) target = $region52
      $region51: #{res_unit_forward.1} parent=47 // pred_region
        %p281 = scmp.lt.s32.totalorder %s15, 1
        %s282 = scalar_select %p281, %s15, 1
        %s283 = smul.addr %s282, 2
        %s284 = smul.addr %s283, 4
        %s285 = scalar_lea.vmem %s0, %s284
      $region52: #{res_unit_forward.1} parent=47 // pred_fallthru
        _
    $region48: #{res_unit_forward.1} parent=5 // pred_fallthru
      _
    %p286 = scmp.le.s32.totalorder 1, %s15
    %p287 = scmp.lt.s32.totalorder %s15, 3
    %p288 = pnand %p286, %p287
    %p289 = pneg %p288
    // Predicated region
    $region53: #{res_unit_forward.1} parent=5 // pred_check
      _
    $region54: #{res_unit_forward.1} parent=5 // pred_check_branch
      %291 = sbr.rel (%p288) target = $region56
    $region55: #{res_unit_forward.1} parent=5 // pred_region
      %s292 = ssub.s32 %s15, 1
      %p293 = scmp.lt.s32.totalorder %s20, 1
      %s294 = scalar_select %p293, %s20, 1
      %s295 = smul.addr %s294, 2
      %s296 = smul.addr %s295, 4
      %s297 = scalar_lea.vmem %s0, %s296
      %p298 = pneg %p41
      %p299 = pneg %p38
      %p300 = pneg %p62
      %p301 = pneg %p59
      %p302 = pneg %p83
      %p303 = pneg %p80
      %p304 = pneg %p104
      %p305 = pneg %p101
      %p306 = pneg %p125
      %p307 = pneg %p122
      %p308 = pneg %p146
      %p309 = pneg %p143
      %p310 = pneg %p167
      %p311 = pneg %p164
      %p312 = pneg %p188
      %p313 = pneg %p185
      %p314 = pneg %p209
      %p315 = pneg %p206
      %p316 = pneg %p235
      %p317 = pneg %p232
      %p318 = scmp.lt.s32.totalorder %s20, 1
      %s319 = scalar_select %p318, %s20, 1
      %s320 = smul.addr %s319, 2
      %s321 = smul.addr %s320, 4
      %s322 = scalar_lea.vmem %s9, %s321
      %p323 = scmp.lt.s32.totalorder %s20, 1
      %s324 = scalar_select %p323, %s20, 1
      %s325 = smul.addr %s324, 2
      %s326 = smul.addr %s325, 4
      %s327 = scalar_lea.vmem %s0, %s326
      %p328 = scmp.lt.s32.totalorder %s20, 1
      %s329 = scalar_select %p328, %s20, 1
      %s330 = smul.addr %s329, 2
      %s331 = smul.addr %s330, 4
      %s332 = scalar_lea.vmem %s9, %s331
      %v333 = vld [vmem:[%s327] sm:$0xff]
      %v334 = vld [vmem:[%s7] sm:$0xf]
      %v335 = vld [vmem:[%s8] sm:$0xf]
      %337 = vset.pattern.permute.xlu0 0
      %338 = vperm.xlu0 %337, %v335
      %v339 = vpop.permute.xlu0 %338
      %v342 = vcombine.high %v333, %v333
      %vm343 = vcmask 31744
      %v345 = vsel %vm343, %v334, 0
      %vm347 = vcmask 1043456
      %v348 = vsel %vm347, %v333, 0
      %v350 = vsel %vm347, %v342, 0
      %352 = vmatprep.subr.mxu0 %v350
      %353 = vmatpush1.msra.mxu0 %v348
      %354 = vmatprep.subr.mxu0 0.0
      %355 = vmatpush1.msra.mxu0 0.0
      %356 = vmatprep.subr.mxu0 0.0
      %357 = vmatpush1.msra.mxu0 0.0
      %358 = vmatprep.subr.mxu0 0.0
      %359 = vmatpush1.msra.mxu0 0.0
      %360 = vmatprep.subr.mxu0 0.0
      %361 = vmatpush1.msra.mxu0 0.0
      %362 = vmatprep.subr.mxu0 0.0
      %363 = vmatpush1.msra.mxu0 0.0
      %364 = vmatprep.subr.mxu0 0.0
      %365 = vmatpush1.msra.mxu0 0.0
      %366 = vmatprep.subr.mxu0 0.0
      %367 = vmatpush1.msra.mxu0 0.0
      %368 = vmatprep.subr.mxu0 0.0
      %369 = vmatpush1.msra.mxu0 0.0
      %370 = vmatprep.subr.mxu0 0.0
      %371 = vmatpush1.msra.mxu0 0.0
      %372 = vmatprep.subr.mxu0 0.0
      %373 = vmatpush1.msra.mxu0 0.0
      %374 = vmatprep.subr.mxu0 0.0
      %375 = vmatpush1.msra.mxu0 0.0
      %376 = vmatprep.subr.mxu0 0.0
      %377 = vmatpush1.msra.mxu0 0.0
      %378 = vmatprep.subr.mxu0 0.0
      %379 = vmatpush1.msra.mxu0 0.0
      %380 = vmatprep.subr.mxu0 0.0
      %381 = vmatpush1.msra.mxu0 0.0
      %382 = vmatprep.subr.mxu0 0.0
      %383 = vmatpush1.msra.mxu0 0.0
      %384 = vmatprep.subr.mxu0 0.0
      %385 = vmatpush1.msra.mxu0 0.0
      %386 = vmatprep.subr.mxu0 0.0
      %387 = vmatpush1.msra.mxu0 0.0
      %388 = vmatprep.subr.mxu0 0.0
      %389 = vmatpush1.msra.mxu0 0.0
      %390 = vmatprep.subr.mxu0 0.0
      %391 = vmatpush1.msra.mxu0 0.0
      %392 = vmatprep.subr.mxu0 0.0
      %393 = vmatpush1.msra.mxu0 0.0
      %394 = vmatprep.subr.mxu0 0.0
      %395 = vmatpush1.msra.mxu0 0.0
      %396 = vmatprep.subr.mxu0 0.0
      %397 = vmatpush1.msra.mxu0 0.0
      %398 = vmatprep.subr.mxu0 0.0
      %399 = vmatpush1.msra.mxu0 0.0
      %400 = vmatprep.subr.mxu0 0.0
      %401 = vmatpush1.msra.mxu0 0.0
      %402 = vmatprep.subr.mxu0 0.0
      %403 = vmatpush1.msra.mxu0 0.0
      %404 = vmatprep.subr.mxu0 0.0
      %405 = vmatpush1.msra.mxu0 0.0
      %406 = vmatprep.subr.mxu0 0.0
      %407 = vmatpush1.msra.mxu0 0.0
      %408 = vmatprep.subr.mxu0 0.0
      %409 = vmatpush1.msra.mxu0 0.0
      %410 = vmatprep.subr.mxu0 0.0
      %411 = vmatpush1.msra.mxu0 0.0
      %412 = vmatprep.subr.mxu0 0.0
      %413 = vmatpush1.msra.mxu0 0.0
      %414 = vmatprep.subr.mxu0 0.0
      %415 = vmatpush1.msra.mxu0 0.0
      %416 = vmatprep.mubr.f32.mxu0 0.0
      %417 = vmatmul.mubr.f32.gmra.mrb[0].mxu0 %v345
      %v418 = vpop.f32.mrb[0].mxu0
      %v419 = vadd.f32 %v339, %v418
      %v420 = vpop.f32.mrb[0].mxu0
      %v421 = vadd.f32 %v339, %v420
      %422 = vdwg.mxu0
      %v423 = vld [vmem:[%s1] sm:$0xf]
      %425 = vset.pattern.permute.xlu0 0
      %426 = vperm.xlu0 %425, %v423
      %v427 = vpop.permute.xlu0 %426
      %v429 = vunpack.c.l.s4 839922192
      %v430 = vunpack.c.0.s8 %v429
      %v431 = vlaneseq
      %v432 = vshrl.u32 %v431, 7
      %v433 = vsub.s32 %v430, %v432
      %v434 = vrot.slane %v427, %v433
      %v436 = vmul.f32 %v333, %v434
      %v437 = vld [vmem:[%s2] sm:$0xf]
      %439 = vset.pattern.permute.xlu0 0
      %440 = vperm.xlu0 %439, %v437
      %v441 = vpop.permute.xlu0 %440
      %v443 = vunpack.c.l.s4 839922192
      %v444 = vunpack.c.0.s8 %v443
      %v445 = vlaneseq
      %v446 = vshrl.u32 %v445, 7
      %v447 = vsub.s32 %v444, %v446
      %v448 = vrot.slane %v441, %v447
      %v450 = vadd.f32 %v436, %v448
      %vm451 = vcmp.ge.f32.partialorder %v450, 0.0
      %v452 = vmul.f32 %v450, 0.2
      %v453 = vsel %vm451, %v450, %v452
      %v454 = vld [vmem:[%s3] sm:$0xf]
      %v455 = vlaneseq
      %v456 = vand.u32 %v455, 127
      %v457 = vadd.s32 %v456, 128
      %vm458 = vcmp.lt.s32.totalorder %v456, 0
      %v459 = vsub.s32 0, %v456
      %v460 = vsel %vm458, %v459, %v456
      %v461 = vshrl.u32 %v460, 4
      %v462 = vand.u32 %v460, 15
      %v463 = vsub.s32 0, %v462
      %v464 = vsel %vm458, %v463, %v462
      %vm465 = vcmp.lt.s32.totalorder %v457, 0
      %v466 = vsub.s32 0, %v457
      %v467 = vsel %vm465, %v466, %v457
      %v468 = vshrl.u32 %v467, 4
      %v469 = vand.u32 %v467, 15
      %v470 = vsub.s32 0, %v469
      %v471 = vsel %vm465, %v470, %v469
      %vm472 = vcmp.ne.s32.totalorder %v464, 0
      %vm473 = vcmp.ne.s32.totalorder %v471, 0
      %vm474 = vcmp.lt.s32.totalorder %v464, 0
      %vm475 = vcmp.lt.s32.totalorder %v471, 0
      %vm476 = vmand %vm474, %vm472
      %vm477 = vmand %vm475, %vm473
      %v478 = vadd.s32 %v464, 16
      %v479 = vadd.s32 %v471, 16
      %v480 = vsel %vm476, %v478, %v464
      %v481 = vsel %vm477, %v479, %v471
      %vm482 = vcmp.eq.s32.totalorder %v480, 15
      %vm483 = vcmp.eq.s32.totalorder %v481, 15
      %v485 = vcombine.high %v453, %v453
      %487 = vrot.lane.b32.xlu0 %v453, 15
      %v488 = vpop.permute.xlu0 %487
      %489 = vrot.lane.b32.xlu0 %v485, 15
      %v490 = vpop.permute.xlu0 %489
      %vm491 = vcmp.lt.s32.totalorder %v456, 15
      %v492 = vsel %vm491, %v488, %v490
      %v493 = vsel %vm491, %v490, %v488
      %494 = vrot.lane.b32.xlu0 %v453, 127
      %v495 = vpop.permute.xlu0 %494
      %496 = vrot.lane.b32.xlu0 %v485, 127
      %v497 = vpop.permute.xlu0 %496
      %vm498 = vcmp.lt.s32.totalorder %v456, 127
      %v499 = vsel %vm498, %v495, %v497
      %v500 = vsel %vm498, %v497, %v495
      %v501 = vsel %vm482, %v493, %v499
      %v502 = vsel %vm483, %v492, %v500
      %vm503 = vcmp.eq.s32.totalorder %v480, 0
      %vm504 = vcmp.eq.s32.totalorder %v481, 0
      %505 = vrot.lane.b32.xlu0 %v453, 113
      %v506 = vpop.permute.xlu0 %505
      %507 = vrot.lane.b32.xlu0 %v485, 113
      %v508 = vpop.permute.xlu0 %507
      %vm509 = vcmp.lt.s32.totalorder %v456, 113
      %v510 = vsel %vm509, %v506, %v508
      %v511 = vsel %vm509, %v508, %v506
      %512 = vrot.lane.b32.xlu0 %v453, 1
      %v513 = vpop.permute.xlu0 %512
      %514 = vrot.lane.b32.xlu0 %v485, 1
      %v515 = vpop.permute.xlu0 %514
      %vm516 = vcmp.lt.s32.totalorder %v456, 1
      %v517 = vsel %vm516, %v513, %v515
      %v518 = vsel %vm516, %v515, %v513
      %v519 = vsel %vm503, %v510, %v518
      %v520 = vsel %vm504, %v511, %v517
      %521 = vrot.lane.b32.xlu0 %v519, 16
      %v522 = vpop.permute.xlu0 %521
      %523 = vrot.lane.b32.xlu0 %v520, 16
      %v524 = vpop.permute.xlu0 %523
      %vm525 = vcmp.lt.s32.totalorder %v456, 16
      %v526 = vsel %vm525, %v522, %v524
      %v527 = vsel %vm525, %v524, %v522
      %528 = vrot.lane.b32.xlu0 %v453, 16
      %v529 = vpop.permute.xlu0 %528
      %530 = vrot.lane.b32.xlu0 %v485, 16
      %v531 = vpop.permute.xlu0 %530
      %v532 = vsel %vm525, %v529, %v531
      %v533 = vsel %vm525, %v531, %v529
      %535 = vrot.lane.b32.xlu0 %v454, 124
      %v536 = vpop.permute.xlu0 %535
      %v537 = vsel %vm343, %v536, 0
      %v540 = vsel %vm347, %v533, 0
      %v543 = vsel %vm347, %v532, 0
      %545 = vmatprep.subr.mxu0 %v543
      %546 = vmatpush1.msra.mxu0 %v540
      %547 = vmatprep.subr.mxu0 0.0
      %548 = vmatpush1.msra.mxu0 0.0
      %549 = vmatprep.subr.mxu0 0.0
      %550 = vmatpush1.msra.mxu0 0.0
      %551 = vmatprep.subr.mxu0 0.0
      %552 = vmatpush1.msra.mxu0 0.0
      %553 = vmatprep.subr.mxu0 0.0
      %554 = vmatpush1.msra.mxu0 0.0
      %555 = vmatprep.subr.mxu0 0.0
      %556 = vmatpush1.msra.mxu0 0.0
      %557 = vmatprep.subr.mxu0 0.0
      %558 = vmatpush1.msra.mxu0 0.0
      %559 = vmatprep.subr.mxu0 0.0
      %560 = vmatpush1.msra.mxu0 0.0
      %561 = vmatprep.subr.mxu0 0.0
      %562 = vmatpush1.msra.mxu0 0.0
      %563 = vmatprep.subr.mxu0 0.0
      %564 = vmatpush1.msra.mxu0 0.0
      %565 = vmatprep.subr.mxu0 0.0
      %566 = vmatpush1.msra.mxu0 0.0
      %567 = vmatprep.subr.mxu0 0.0
      %568 = vmatpush1.msra.mxu0 0.0
      %569 = vmatprep.subr.mxu0 0.0
      %570 = vmatpush1.msra.mxu0 0.0
      %571 = vmatprep.subr.mxu0 0.0
      %572 = vmatpush1.msra.mxu0 0.0
      %573 = vmatprep.subr.mxu0 0.0
      %574 = vmatpush1.msra.mxu0 0.0
      %575 = vmatprep.subr.mxu0 0.0
      %576 = vmatpush1.msra.mxu0 0.0
      %577 = vmatprep.subr.mxu0 0.0
      %578 = vmatpush1.msra.mxu0 0.0
      %579 = vmatprep.subr.mxu0 0.0
      %580 = vmatpush1.msra.mxu0 0.0
      %581 = vmatprep.subr.mxu0 0.0
      %582 = vmatpush1.msra.mxu0 0.0
      %583 = vmatprep.subr.mxu0 0.0
      %584 = vmatpush1.msra.mxu0 0.0
      %585 = vmatprep.subr.mxu0 0.0
      %586 = vmatpush1.msra.mxu0 0.0
      %587 = vmatprep.subr.mxu0 0.0
      %588 = vmatpush1.msra.mxu0 0.0
      %589 = vmatprep.subr.mxu0 0.0
      %590 = vmatpush1.msra.mxu0 0.0
      %591 = vmatprep.subr.mxu0 0.0
      %592 = vmatpush1.msra.mxu0 0.0
      %593 = vmatprep.subr.mxu0 0.0
      %594 = vmatpush1.msra.mxu0 0.0
      %595 = vmatprep.subr.mxu0 0.0
      %596 = vmatpush1.msra.mxu0 0.0
      %597 = vmatprep.subr.mxu0 0.0
      %598 = vmatpush1.msra.mxu0 0.0
      %599 = vmatprep.subr.mxu0 0.0
      %600 = vmatpush1.msra.mxu0 0.0
      %601 = vmatprep.subr.mxu0 0.0
      %602 = vmatpush1.msra.mxu0 0.0
      %603 = vmatprep.subr.mxu0 0.0
      %604 = vmatpush1.msra.mxu0 0.0
      %605 = vmatprep.subr.mxu0 0.0
      %606 = vmatpush1.msra.mxu0 0.0
      %607 = vmatprep.subr.mxu0 0.0
      %608 = vmatpush1.msra.mxu0 0.0
      %609 = vmatprep.mubr.f32.mxu0 0.0
      %610 = vmatmul.mubr.f32.gmra.mrb[0].mxu0 %v537
      %v611 = vpop.f32.mrb[0].mxu0
      %v612 = vadd.f32 0.0, %v611
      %v613 = vpop.f32.mrb[0].mxu0
      %v614 = vadd.f32 0.0, %v613
      %615 = vdwg.mxu0
      %v616 = vsel %vm343, %v454, 0
      %v619 = vsel %vm347, %v527, 0
      %v622 = vsel %vm347, %v526, 0
      %624 = vmatprep.subr.mxu0 %v622
      %625 = vmatpush1.msra.mxu0 %v619
      %626 = vmatprep.subr.mxu0 0.0
      %627 = vmatpush1.msra.mxu0 0.0
      %628 = vmatprep.subr.mxu0 0.0
      %629 = vmatpush1.msra.mxu0 0.0
      %630 = vmatprep.subr.mxu0 0.0
      %631 = vmatpush1.msra.mxu0 0.0
      %632 = vmatprep.subr.mxu0 0.0
      %633 = vmatpush1.msra.mxu0 0.0
      %634 = vmatprep.subr.mxu0 0.0
      %635 = vmatpush1.msra.mxu0 0.0
      %636 = vmatprep.subr.mxu0 0.0
      %637 = vmatpush1.msra.mxu0 0.0
      %638 = vmatprep.subr.mxu0 0.0
      %639 = vmatpush1.msra.mxu0 0.0
      %640 = vmatprep.subr.mxu0 0.0
      %641 = vmatpush1.msra.mxu0 0.0
      %642 = vmatprep.subr.mxu0 0.0
      %643 = vmatpush1.msra.mxu0 0.0
      %644 = vmatprep.subr.mxu0 0.0
      %645 = vmatpush1.msra.mxu0 0.0
      %646 = vmatprep.subr.mxu0 0.0
      %647 = vmatpush1.msra.mxu0 0.0
      %648 = vmatprep.subr.mxu0 0.0
      %649 = vmatpush1.msra.mxu0 0.0
      %650 = vmatprep.subr.mxu0 0.0
      %651 = vmatpush1.msra.mxu0 0.0
      %652 = vmatprep.subr.mxu0 0.0
      %653 = vmatpush1.msra.mxu0 0.0
      %654 = vmatprep.subr.mxu0 0.0
      %655 = vmatpush1.msra.mxu0 0.0
      %656 = vmatprep.subr.mxu0 0.0
      %657 = vmatpush1.msra.mxu0 0.0
      %658 = vmatprep.subr.mxu0 0.0
      %659 = vmatpush1.msra.mxu0 0.0
      %660 = vmatprep.subr.mxu0 0.0
      %661 = vmatpush1.msra.mxu0 0.0
      %662 = vmatprep.subr.mxu0 0.0
      %663 = vmatpush1.msra.mxu0 0.0
      %664 = vmatprep.subr.mxu0 0.0
      %665 = vmatpush1.msra.mxu0 0.0
      %666 = vmatprep.subr.mxu0 0.0
      %667 = vmatpush1.msra.mxu0 0.0
      %668 = vmatprep.subr.mxu0 0.0
      %669 = vmatpush1.msra.mxu0 0.0
      %670 = vmatprep.subr.mxu0 0.0
      %671 = vmatpush1.msra.mxu0 0.0
      %672 = vmatprep.subr.mxu0 0.0
      %673 = vmatpush1.msra.mxu0 0.0
      %674 = vmatprep.subr.mxu0 0.0
      %675 = vmatpush1.msra.mxu0 0.0
      %676 = vmatprep.subr.mxu0 0.0
      %677 = vmatpush1.msra.mxu0 0.0
      %678 = vmatprep.subr.mxu0 0.0
      %679 = vmatpush1.msra.mxu0 0.0
      %680 = vmatprep.subr.mxu0 0.0
      %681 = vmatpush1.msra.mxu0 0.0
      %682 = vmatprep.subr.mxu0 0.0
      %683 = vmatpush1.msra.mxu0 0.0
      %684 = vmatprep.subr.mxu0 0.0
      %685 = vmatpush1.msra.mxu0 0.0
      %686 = vmatprep.subr.mxu0 0.0
      %687 = vmatpush1.msra.mxu0 0.0
      %688 = vmatprep.mubr.f32.mxu0 0.0
      %689 = vmatmul.mubr.f32.gmra.mrb[0].mxu0 %v616
      %v690 = vpop.f32.mrb[0].mxu0
      %v691 = vadd.f32 %v612, %v690
      %v692 = vpop.f32.mrb[0].mxu0
      %v693 = vadd.f32 %v614, %v692
      %694 = vdwg.mxu0
      %695 = vrot.lane.b32.xlu0 %v501, 16
      %v696 = vpop.permute.xlu0 %695
      %697 = vrot.lane.b32.xlu0 %v502, 16
      %v698 = vpop.permute.xlu0 %697
      %v699 = vsel %vm525, %v696, %v698
      %v700 = vsel %vm525, %v698, %v696
      %701 = vrot.lane.b32.xlu0 %v454, 120
      %v702 = vpop.permute.xlu0 %701
      %v703 = vsel %vm343, %v702, 0
      %v706 = vsel %vm347, %v700, 0
      %v709 = vsel %vm347, %v699, 0
      %711 = vmatprep.subr.mxu0 %v709
      %712 = vmatpush1.msra.mxu0 %v706
      %713 = vmatprep.subr.mxu0 0.0
      %714 = vmatpush1.msra.mxu0 0.0
      %715 = vmatprep.subr.mxu0 0.0
      %716 = vmatpush1.msra.mxu0 0.0
      %717 = vmatprep.subr.mxu0 0.0
      %718 = vmatpush1.msra.mxu0 0.0
      %719 = vmatprep.subr.mxu0 0.0
      %720 = vmatpush1.msra.mxu0 0.0
      %721 = vmatprep.subr.mxu0 0.0
      %722 = vmatpush1.msra.mxu0 0.0
      %723 = vmatprep.subr.mxu0 0.0
      %724 = vmatpush1.msra.mxu0 0.0
      %725 = vmatprep.subr.mxu0 0.0
      %726 = vmatpush1.msra.mxu0 0.0
      %727 = vmatprep.subr.mxu0 0.0
      %728 = vmatpush1.msra.mxu0 0.0
      %729 = vmatprep.subr.mxu0 0.0
      %730 = vmatpush1.msra.mxu0 0.0
      %731 = vmatprep.subr.mxu0 0.0
      %732 = vmatpush1.msra.mxu0 0.0
      %733 = vmatprep.subr.mxu0 0.0
      %734 = vmatpush1.msra.mxu0 0.0
      %735 = vmatprep.subr.mxu0 0.0
      %736 = vmatpush1.msra.mxu0 0.0
      %737 = vmatprep.subr.mxu0 0.0
      %738 = vmatpush1.msra.mxu0 0.0
      %739 = vmatprep.subr.mxu0 0.0
      %740 = vmatpush1.msra.mxu0 0.0
      %741 = vmatprep.subr.mxu0 0.0
      %742 = vmatpush1.msra.mxu0 0.0
      %743 = vmatprep.subr.mxu0 0.0
      %744 = vmatpush1.msra.mxu0 0.0
      %745 = vmatprep.subr.mxu0 0.0
      %746 = vmatpush1.msra.mxu0 0.0
      %747 = vmatprep.subr.mxu0 0.0
      %748 = vmatpush1.msra.mxu0 0.0
      %749 = vmatprep.subr.mxu0 0.0
      %750 = vmatpush1.msra.mxu0 0.0
      %751 = vmatprep.subr.mxu0 0.0
      %752 = vmatpush1.msra.mxu0 0.0
      %753 = vmatprep.subr.mxu0 0.0
      %754 = vmatpush1.msra.mxu0 0.0
      %755 = vmatprep.subr.mxu0 0.0
      %756 = vmatpush1.msra.mxu0 0.0
      %757 = vmatprep.subr.mxu0 0.0
      %758 = vmatpush1.msra.mxu0 0.0
      %759 = vmatprep.subr.mxu0 0.0
      %760 = vmatpush1.msra.mxu0 0.0
      %761 = vmatprep.subr.mxu0 0.0
      %762 = vmatpush1.msra.mxu0 0.0
      %763 = vmatprep.subr.mxu0 0.0
      %764 = vmatpush1.msra.mxu0 0.0
      %765 = vmatprep.subr.mxu0 0.0
      %766 = vmatpush1.msra.mxu0 0.0
      %767 = vmatprep.subr.mxu0 0.0
      %768 = vmatpush1.msra.mxu0 0.0
      %769 = vmatprep.subr.mxu0 0.0
      %770 = vmatpush1.msra.mxu0 0.0
      %771 = vmatprep.subr.mxu0 0.0
      %772 = vmatpush1.msra.mxu0 0.0
      %773 = vmatprep.subr.mxu0 0.0
      %774 = vmatpush1.msra.mxu0 0.0
      %775 = vmatprep.mubr.f32.mxu0 0.0
      %776 = vmatmul.mubr.f32.gmra.mrb[0].mxu0 %v703
      %v777 = vpop.f32.mrb[0].mxu0
      %v778 = vadd.f32 0.0, %v777
      %v779 = vpop.f32.mrb[0].mxu0
      %v780 = vadd.f32 0.0, %v779
      %781 = vdwg.mxu0
      %v782 = vadd.f32 %v691, %v778
      %v783 = vadd.f32 %v693, %v780
      %784 = vrot.lane.b32.xlu0 %v454, 116
      %v785 = vpop.permute.xlu0 %784
      %v786 = vsel %vm343, %v785, 0
      %v789 = vsel %vm347, %v519, 0
      %v792 = vsel %vm347, %v520, 0
      %794 = vmatprep.subr.mxu0 %v792
      %795 = vmatpush1.msra.mxu0 %v789
      %796 = vmatprep.subr.mxu0 0.0
      %797 = vmatpush1.msra.mxu0 0.0
      %798 = vmatprep.subr.mxu0 0.0
      %799 = vmatpush1.msra.mxu0 0.0
      %800 = vmatprep.subr.mxu0 0.0
      %801 = vmatpush1.msra.mxu0 0.0
      %802 = vmatprep.subr.mxu0 0.0
      %803 = vmatpush1.msra.mxu0 0.0
      %804 = vmatprep.subr.mxu0 0.0
      %805 = vmatpush1.msra.mxu0 0.0
      %806 = vmatprep.subr.mxu0 0.0
      %807 = vmatpush1.msra.mxu0 0.0
      %808 = vmatprep.subr.mxu0 0.0
      %809 = vmatpush1.msra.mxu0 0.0
      %810 = vmatprep.subr.mxu0 0.0
      %811 = vmatpush1.msra.mxu0 0.0
      %812 = vmatprep.subr.mxu0 0.0
      %813 = vmatpush1.msra.mxu0 0.0
      %814 = vmatprep.subr.mxu0 0.0
      %815 = vmatpush1.msra.mxu0 0.0
      %816 = vmatprep.subr.mxu0 0.0
      %817 = vmatpush1.msra.mxu0 0.0
      %818 = vmatprep.subr.mxu0 0.0
      %819 = vmatpush1.msra.mxu0 0.0
      %820 = vmatprep.subr.mxu0 0.0
      %821 = vmatpush1.msra.mxu0 0.0
      %822 = vmatprep.subr.mxu0 0.0
      %823 = vmatpush1.msra.mxu0 0.0
      %824 = vmatprep.subr.mxu0 0.0
      %825 = vmatpush1.msra.mxu0 0.0
      %826 = vmatprep.subr.mxu0 0.0
      %827 = vmatpush1.msra.mxu0 0.0
      %828 = vmatprep.subr.mxu0 0.0
      %829 = vmatpush1.msra.mxu0 0.0
      %830 = vmatprep.subr.mxu0 0.0
      %831 = vmatpush1.msra.mxu0 0.0
      %832 = vmatprep.subr.mxu0 0.0
      %833 = vmatpush1.msra.mxu0 0.0
      %834 = vmatprep.subr.mxu0 0.0
      %835 = vmatpush1.msra.mxu0 0.0
      %836 = vmatprep.subr.mxu0 0.0
      %837 = vmatpush1.msra.mxu0 0.0
      %838 = vmatprep.subr.mxu0 0.0
      %839 = vmatpush1.msra.mxu0 0.0
      %840 = vmatprep.subr.mxu0 0.0
      %841 = vmatpush1.msra.mxu0 0.0
      %842 = vmatprep.subr.mxu0 0.0
      %843 = vmatpush1.msra.mxu0 0.0
      %844 = vmatprep.subr.mxu0 0.0
      %845 = vmatpush1.msra.mxu0 0.0
      %846 = vmatprep.subr.mxu0 0.0
      %847 = vmatpush1.msra.mxu0 0.0
      %848 = vmatprep.subr.mxu0 0.0
      %849 = vmatpush1.msra.mxu0 0.0
      %850 = vmatprep.subr.mxu0 0.0
      %851 = vmatpush1.msra.mxu0 0.0
      %852 = vmatprep.subr.mxu0 0.0
      %853 = vmatpush1.msra.mxu0 0.0
      %854 = vmatprep.subr.mxu0 0.0
      %855 = vmatpush1.msra.mxu0 0.0
      %856 = vmatprep.subr.mxu0 0.0
      %857 = vmatpush1.msra.mxu0 0.0
      %858 = vmatprep.mubr.f32.mxu0 0.0
      %859 = vmatmul.mubr.f32.gmra.mrb[0].mxu0 %v786
      %v860 = vpop.f32.mrb[0].mxu0
      %v861 = vadd.f32 0.0, %v860
      %v862 = vpop.f32.mrb[0].mxu0
      %v863 = vadd.f32 0.0, %v862
      %864 = vdwg.mxu0
      %v865 = vadd.f32 %v782, %v861
      %v866 = vadd.f32 %v783, %v863
      %867 = vrot.lane.b32.xlu0 %v454, 112
      %v868 = vpop.permute.xlu0 %867
      %v869 = vsel %vm343, %v868, 0
      %v871 = vsel %vm347, %v453, 0
      %v873 = vsel %vm347, %v485, 0
      %875 = vmatprep.subr.mxu0 %v873
      %876 = vmatpush1.msra.mxu0 %v871
      %877 = vmatprep.subr.mxu0 0.0
      %878 = vmatpush1.msra.mxu0 0.0
      %879 = vmatprep.subr.mxu0 0.0
      %880 = vmatpush1.msra.mxu0 0.0
      %881 = vmatprep.subr.mxu0 0.0
      %882 = vmatpush1.msra.mxu0 0.0
      %883 = vmatprep.subr.mxu0 0.0
      %884 = vmatpush1.msra.mxu0 0.0
      %885 = vmatprep.subr.mxu0 0.0
      %886 = vmatpush1.msra.mxu0 0.0
      %887 = vmatprep.subr.mxu0 0.0
      %888 = vmatpush1.msra.mxu0 0.0
      %889 = vmatprep.subr.mxu0 0.0
      %890 = vmatpush1.msra.mxu0 0.0
      %891 = vmatprep.subr.mxu0 0.0
      %892 = vmatpush1.msra.mxu0 0.0
      %893 = vmatprep.subr.mxu0 0.0
      %894 = vmatpush1.msra.mxu0 0.0
      %895 = vmatprep.subr.mxu0 0.0
      %896 = vmatpush1.msra.mxu0 0.0
      %897 = vmatprep.subr.mxu0 0.0
      %898 = vmatpush1.msra.mxu0 0.0
      %899 = vmatprep.subr.mxu0 0.0
      %900 = vmatpush1.msra.mxu0 0.0
      %901 = vmatprep.subr.mxu0 0.0
      %902 = vmatpush1.msra.mxu0 0.0
      %903 = vmatprep.subr.mxu0 0.0
      %904 = vmatpush1.msra.mxu0 0.0
      %905 = vmatprep.subr.mxu0 0.0
      %906 = vmatpush1.msra.mxu0 0.0
      %907 = vmatprep.subr.mxu0 0.0
      %908 = vmatpush1.msra.mxu0 0.0
      %909 = vmatprep.subr.mxu0 0.0
      %910 = vmatpush1.msra.mxu0 0.0
      %911 = vmatprep.subr.mxu0 0.0
      %912 = vmatpush1.msra.mxu0 0.0
      %913 = vmatprep.subr.mxu0 0.0
      %914 = vmatpush1.msra.mxu0 0.0
      %915 = vmatprep.subr.mxu0 0.0
      %916 = vmatpush1.msra.mxu0 0.0
      %917 = vmatprep.subr.mxu0 0.0
      %918 = vmatpush1.msra.mxu0 0.0
      %919 = vmatprep.subr.mxu0 0.0
      %920 = vmatpush1.msra.mxu0 0.0
      %921 = vmatprep.subr.mxu0 0.0
      %922 = vmatpush1.msra.mxu0 0.0
      %923 = vmatprep.subr.mxu0 0.0
      %924 = vmatpush1.msra.mxu0 0.0
      %925 = vmatprep.subr.mxu0 0.0
      %926 = vmatpush1.msra.mxu0 0.0
      %927 = vmatprep.subr.mxu0 0.0
      %928 = vmatpush1.msra.mxu0 0.0
      %929 = vmatprep.subr.mxu0 0.0
      %930 = vmatpush1.msra.mxu0 0.0
      %931 = vmatprep.subr.mxu0 0.0
      %932 = vmatpush1.msra.mxu0 0.0
      %933 = vmatprep.subr.mxu0 0.0
      %934 = vmatpush1.msra.mxu0 0.0
      %935 = vmatprep.subr.mxu0 0.0
      %936 = vmatpush1.msra.mxu0 0.0
      %937 = vmatprep.subr.mxu0 0.0
      %938 = vmatpush1.msra.mxu0 0.0
      %939 = vmatprep.mubr.f32.mxu0 0.0
      %940 = vmatmul.mubr.f32.gmra.mrb[0].mxu0 %v869
      %v941 = vpop.f32.mrb[0].mxu0
      %v942 = vadd.f32 0.0, %v941
      %v943 = vpop.f32.mrb[0].mxu0
      %v944 = vadd.f32 0.0, %v943
      %945 = vdwg.mxu0
      %v946 = vadd.f32 %v865, %v942
      %v947 = vadd.f32 %v866, %v944
      %948 = vrot.lane.b32.xlu0 %v454, 108
      %v949 = vpop.permute.xlu0 %948
      %v950 = vsel %vm343, %v949, 0
      %v953 = vsel %vm347, %v501, 0
      %v956 = vsel %vm347, %v502, 0
      %958 = vmatprep.subr.mxu0 %v956
      %959 = vmatpush1.msra.mxu0 %v953
      %960 = vmatprep.subr.mxu0 0.0
      %961 = vmatpush1.msra.mxu0 0.0
      %962 = vmatprep.subr.mxu0 0.0
      %963 = vmatpush1.msra.mxu0 0.0
      %964 = vmatprep.subr.mxu0 0.0
      %965 = vmatpush1.msra.mxu0 0.0
      %966 = vmatprep.subr.mxu0 0.0
      %967 = vmatpush1.msra.mxu0 0.0
      %968 = vmatprep.subr.mxu0 0.0
      %969 = vmatpush1.msra.mxu0 0.0
      %970 = vmatprep.subr.mxu0 0.0
      %971 = vmatpush1.msra.mxu0 0.0
      %972 = vmatprep.subr.mxu0 0.0
      %973 = vmatpush1.msra.mxu0 0.0
      %974 = vmatprep.subr.mxu0 0.0
      %975 = vmatpush1.msra.mxu0 0.0
      %976 = vmatprep.subr.mxu0 0.0
      %977 = vmatpush1.msra.mxu0 0.0
      %978 = vmatprep.subr.mxu0 0.0
      %979 = vmatpush1.msra.mxu0 0.0
      %980 = vmatprep.subr.mxu0 0.0
      %981 = vmatpush1.msra.mxu0 0.0
      %982 = vmatprep.subr.mxu0 0.0
      %983 = vmatpush1.msra.mxu0 0.0
      %984 = vmatprep.subr.mxu0 0.0
      %985 = vmatpush1.msra.mxu0 0.0
      %986 = vmatprep.subr.mxu0 0.0
      %987 = vmatpush1.msra.mxu0 0.0
      %988 = vmatprep.subr.mxu0 0.0
      %989 = vmatpush1.msra.mxu0 0.0
      %990 = vmatprep.subr.mxu0 0.0
      %991 = vmatpush1.msra.mxu0 0.0
      %992 = vmatprep.subr.mxu0 0.0
      %993 = vmatpush1.msra.mxu0 0.0
      %994 = vmatprep.subr.mxu0 0.0
      %995 = vmatpush1.msra.mxu0 0.0
      %996 = vmatprep.subr.mxu0 0.0
      %997 = vmatpush1.msra.mxu0 0.0
      %998 = vmatprep.subr.mxu0 0.0
      %999 = vmatpush1.msra.mxu0 0.0
      %1000 = vmatprep.subr.mxu0 0.0
      %1001 = vmatpush1.msra.mxu0 0.0
      %1002 = vmatprep.subr.mxu0 0.0
      %1003 = vmatpush1.msra.mxu0 0.0
      %1004 = vmatprep.subr.mxu0 0.0
      %1005 = vmatpush1.msra.mxu0 0.0
      %1006 = vmatprep.subr.mxu0 0.0
      %1007 = vmatpush1.msra.mxu0 0.0
      %1008 = vmatprep.subr.mxu0 0.0
      %1009 = vmatpush1.msra.mxu0 0.0
      %1010 = vmatprep.subr.mxu0 0.0
      %1011 = vmatpush1.msra.mxu0 0.0
      %1012 = vmatprep.subr.mxu0 0.0
      %1013 = vmatpush1.msra.mxu0 0.0
      %1014 = vmatprep.subr.mxu0 0.0
      %1015 = vmatpush1.msra.mxu0 0.0
      %1016 = vmatprep.subr.mxu0 0.0
      %1017 = vmatpush1.msra.mxu0 0.0
      %1018 = vmatprep.subr.mxu0 0.0
      %1019 = vmatpush1.msra.mxu0 0.0
      %1020 = vmatprep.subr.mxu0 0.0
      %1021 = vmatpush1.msra.mxu0 0.0
      %1022 = vmatprep.mubr.f32.mxu0 0.0
      %1023 = vmatmul.mubr.f32.gmra.mrb[0].mxu0 %v950
      %v1024 = vpop.f32.mrb[0].mxu0
      %v1025 = vadd.f32 0.0, %v1024
      %v1026 = vpop.f32.mrb[0].mxu0
      %v1027 = vadd.f32 0.0, %v1026
      %1028 = vdwg.mxu0
      %v1029 = vadd.f32 %v946, %v1025
      %v1030 = vadd.f32 %v947, %v1027
      %1031 = vrot.lane.b32.xlu0 %v519, 112
      %v1032 = vpop.permute.xlu0 %1031
      %1033 = vrot.lane.b32.xlu0 %v520, 112
      %v1034 = vpop.permute.xlu0 %1033
      %vm1035 = vcmp.lt.s32.totalorder %v456, 112
      %v1036 = vsel %vm1035, %v1032, %v1034
      %v1037 = vsel %vm1035, %v1034, %v1032
      %1038 = vrot.lane.b32.xlu0 %v454, 104
      %v1039 = vpop.permute.xlu0 %1038
      %v1040 = vsel %vm343, %v1039, 0
      %v1043 = vsel %vm347, %v1036, 0
      %v1046 = vsel %vm347, %v1037, 0
      %1048 = vmatprep.subr.mxu0 %v1046
      %1049 = vmatpush1.msra.mxu0 %v1043
      %1050 = vmatprep.subr.mxu0 0.0
      %1051 = vmatpush1.msra.mxu0 0.0
      %1052 = vmatprep.subr.mxu0 0.0
      %1053 = vmatpush1.msra.mxu0 0.0
      %1054 = vmatprep.subr.mxu0 0.0
      %1055 = vmatpush1.msra.mxu0 0.0
      %1056 = vmatprep.subr.mxu0 0.0
      %1057 = vmatpush1.msra.mxu0 0.0
      %1058 = vmatprep.subr.mxu0 0.0
      %1059 = vmatpush1.msra.mxu0 0.0
      %1060 = vmatprep.subr.mxu0 0.0
      %1061 = vmatpush1.msra.mxu0 0.0
      %1062 = vmatprep.subr.mxu0 0.0
      %1063 = vmatpush1.msra.mxu0 0.0
      %1064 = vmatprep.subr.mxu0 0.0
      %1065 = vmatpush1.msra.mxu0 0.0
      %1066 = vmatprep.subr.mxu0 0.0
      %1067 = vmatpush1.msra.mxu0 0.0
      %1068 = vmatprep.subr.mxu0 0.0
      %1069 = vmatpush1.msra.mxu0 0.0
      %1070 = vmatprep.subr.mxu0 0.0
      %1071 = vmatpush1.msra.mxu0 0.0
      %1072 = vmatprep.subr.mxu0 0.0
      %1073 = vmatpush1.msra.mxu0 0.0
      %1074 = vmatprep.subr.mxu0 0.0
      %1075 = vmatpush1.msra.mxu0 0.0
      %1076 = vmatprep.subr.mxu0 0.0
      %1077 = vmatpush1.msra.mxu0 0.0
      %1078 = vmatprep.subr.mxu0 0.0
      %1079 = vmatpush1.msra.mxu0 0.0
      %1080 = vmatprep.subr.mxu0 0.0
      %1081 = vmatpush1.msra.mxu0 0.0
      %1082 = vmatprep.subr.mxu0 0.0
      %1083 = vmatpush1.msra.mxu0 0.0
      %1084 = vmatprep.subr.mxu0 0.0
      %1085 = vmatpush1.msra.mxu0 0.0
      %1086 = vmatprep.subr.mxu0 0.0
      %1087 = vmatpush1.msra.mxu0 0.0
      %1088 = vmatprep.subr.mxu0 0.0
      %1089 = vmatpush1.msra.mxu0 0.0
      %1090 = vmatprep.subr.mxu0 0.0
      %1091 = vmatpush1.msra.mxu0 0.0
      %1092 = vmatprep.subr.mxu0 0.0
      %1093 = vmatpush1.msra.mxu0 0.0
      %1094 = vmatprep.subr.mxu0 0.0
      %1095 = vmatpush1.msra.mxu0 0.0
      %1096 = vmatprep.subr.mxu0 0.0
      %1097 = vmatpush1.msra.mxu0 0.0
      %1098 = vmatprep.subr.mxu0 0.0
      %1099 = vmatpush1.msra.mxu0 0.0
      %1100 = vmatprep.subr.mxu0 0.0
      %1101 = vmatpush1.msra.mxu0 0.0
      %1102 = vmatprep.subr.mxu0 0.0
      %1103 = vmatpush1.msra.mxu0 0.0
      %1104 = vmatprep.subr.mxu0 0.0
      %1105 = vmatpush1.msra.mxu0 0.0
      %1106 = vmatprep.subr.mxu0 0.0
      %1107 = vmatpush1.msra.mxu0 0.0
      %1108 = vmatprep.subr.mxu0 0.0
      %1109 = vmatpush1.msra.mxu0 0.0
      %1110 = vmatprep.subr.mxu0 0.0
      %1111 = vmatpush1.msra.mxu0 0.0
      %1112 = vmatprep.mubr.f32.mxu0 0.0
      %1113 = vmatmul.mubr.f32.gmra.mrb[0].mxu0 %v1040
      %v1114 = vpop.f32.mrb[0].mxu0
      %v1115 = vadd.f32 0.0, %v1114
      %v1116 = vpop.f32.mrb[0].mxu0
      %v1117 = vadd.f32 0.0, %v1116
      %1118 = vdwg.mxu0
      %v1119 = vadd.f32 %v1029, %v1115
      %v1120 = vadd.f32 %v1030, %v1117
      %1121 = vrot.lane.b32.xlu0 %v453, 112
      %v1122 = vpop.permute.xlu0 %1121
      %1123 = vrot.lane.b32.xlu0 %v485, 112
      %v1124 = vpop.permute.xlu0 %1123
      %v1125 = vsel %vm1035, %v1122, %v1124
      %v1126 = vsel %vm1035, %v1124, %v1122
      %1127 = vrot.lane.b32.xlu0 %v454, 100
      %v1128 = vpop.permute.xlu0 %1127
      %v1129 = vsel %vm343, %v1128, 0
      %v1132 = vsel %vm347, %v1125, 0
      %v1135 = vsel %vm347, %v1126, 0
      %1137 = vmatprep.subr.mxu0 %v1135
      %1138 = vmatpush1.msra.mxu0 %v1132
      %1139 = vmatprep.subr.mxu0 0.0
      %1140 = vmatpush1.msra.mxu0 0.0
      %1141 = vmatprep.subr.mxu0 0.0
      %1142 = vmatpush1.msra.mxu0 0.0
      %1143 = vmatprep.subr.mxu0 0.0
      %1144 = vmatpush1.msra.mxu0 0.0
      %1145 = vmatprep.subr.mxu0 0.0
      %1146 = vmatpush1.msra.mxu0 0.0
      %1147 = vmatprep.subr.mxu0 0.0
      %1148 = vmatpush1.msra.mxu0 0.0
      %1149 = vmatprep.subr.mxu0 0.0
      %1150 = vmatpush1.msra.mxu0 0.0
      %1151 = vmatprep.subr.mxu0 0.0
      %1152 = vmatpush1.msra.mxu0 0.0
      %1153 = vmatprep.subr.mxu0 0.0
      %1154 = vmatpush1.msra.mxu0 0.0
      %1155 = vmatprep.subr.mxu0 0.0
      %1156 = vmatpush1.msra.mxu0 0.0
      %1157 = vmatprep.subr.mxu0 0.0
      %1158 = vmatpush1.msra.mxu0 0.0
      %1159 = vmatprep.subr.mxu0 0.0
      %1160 = vmatpush1.msra.mxu0 0.0
      %1161 = vmatprep.subr.mxu0 0.0
      %1162 = vmatpush1.msra.mxu0 0.0
      %1163 = vmatprep.subr.mxu0 0.0
      %1164 = vmatpush1.msra.mxu0 0.0
      %1165 = vmatprep.subr.mxu0 0.0
      %1166 = vmatpush1.msra.mxu0 0.0
      %1167 = vmatprep.subr.mxu0 0.0
      %1168 = vmatpush1.msra.mxu0 0.0
      %1169 = vmatprep.subr.mxu0 0.0
      %1170 = vmatpush1.msra.mxu0 0.0
      %1171 = vmatprep.subr.mxu0 0.0
      %1172 = vmatpush1.msra.mxu0 0.0
      %1173 = vmatprep.subr.mxu0 0.0
      %1174 = vmatpush1.msra.mxu0 0.0
      %1175 = vmatprep.subr.mxu0 0.0
      %1176 = vmatpush1.msra.mxu0 0.0
      %1177 = vmatprep.subr.mxu0 0.0
      %1178 = vmatpush1.msra.mxu0 0.0
      %1179 = vmatprep.subr.mxu0 0.0
      %1180 = vmatpush1.msra.mxu0 0.0
      %1181 = vmatprep.subr.mxu0 0.0
      %1182 = vmatpush1.msra.mxu0 0.0
      %1183 = vmatprep.subr.mxu0 0.0
      %1184 = vmatpush1.msra.mxu0 0.0
      %1185 = vmatprep.subr.mxu0 0.0
      %1186 = vmatpush1.msra.mxu0 0.0
      %1187 = vmatprep.subr.mxu0 0.0
      %1188 = vmatpush1.msra.mxu0 0.0
      %1189 = vmatprep.subr.mxu0 0.0
      %1190 = vmatpush1.msra.mxu0 0.0
      %1191 = vmatprep.subr.mxu0 0.0
      %1192 = vmatpush1.msra.mxu0 0.0
      %1193 = vmatprep.subr.mxu0 0.0
      %1194 = vmatpush1.msra.mxu0 0.0
      %1195 = vmatprep.subr.mxu0 0.0
      %1196 = vmatpush1.msra.mxu0 0.0
      %1197 = vmatprep.subr.mxu0 0.0
      %1198 = vmatpush1.msra.mxu0 0.0
      %1199 = vmatprep.subr.mxu0 0.0
      %1200 = vmatpush1.msra.mxu0 0.0
      %1201 = vmatprep.mubr.f32.mxu0 0.0
      %1202 = vmatmul.mubr.f32.gmra.mrb[0].mxu0 %v1129
      %v1203 = vpop.f32.mrb[0].mxu0
      %v1204 = vadd.f32 0.0, %v1203
      %v1205 = vpop.f32.mrb[0].mxu0
      %v1206 = vadd.f32 0.0, %v1205
      %1207 = vdwg.mxu0
      %v1208 = vadd.f32 %v1119, %v1204
      %v1209 = vadd.f32 %v1120, %v1206
      %1210 = vrot.lane.b32.xlu0 %v501, 112
      %v1211 = vpop.permute.xlu0 %1210
      %1212 = vrot.lane.b32.xlu0 %v502, 112
      %v1213 = vpop.permute.xlu0 %1212
      %v1214 = vsel %vm1035, %v1211, %v1213
      %v1215 = vsel %vm1035, %v1213, %v1211
      %1216 = vrot.lane.b32.xlu0 %v454, 96
      %v1217 = vpop.permute.xlu0 %1216
      %v1218 = vsel %vm343, %v1217, 0
      %v1221 = vsel %vm347, %v1214, 0
      %v1224 = vsel %vm347, %v1215, 0
      %1226 = vmatprep.subr.mxu0 %v1224
      %1227 = vmatpush1.msra.mxu0 %v1221
      %1228 = vmatprep.subr.mxu0 0.0
      %1229 = vmatpush1.msra.mxu0 0.0
      %1230 = vmatprep.subr.mxu0 0.0
      %1231 = vmatpush1.msra.mxu0 0.0
      %1232 = vmatprep.subr.mxu0 0.0
      %1233 = vmatpush1.msra.mxu0 0.0
      %1234 = vmatprep.subr.mxu0 0.0
      %1235 = vmatpush1.msra.mxu0 0.0
      %1236 = vmatprep.subr.mxu0 0.0
      %1237 = vmatpush1.msra.mxu0 0.0
      %1238 = vmatprep.subr.mxu0 0.0
      %1239 = vmatpush1.msra.mxu0 0.0
      %1240 = vmatprep.subr.mxu0 0.0
      %1241 = vmatpush1.msra.mxu0 0.0
      %1242 = vmatprep.subr.mxu0 0.0
      %1243 = vmatpush1.msra.mxu0 0.0
      %1244 = vmatprep.subr.mxu0 0.0
      %1245 = vmatpush1.msra.mxu0 0.0
      %1246 = vmatprep.subr.mxu0 0.0
      %1247 = vmatpush1.msra.mxu0 0.0
      %1248 = vmatprep.subr.mxu0 0.0
      %1249 = vmatpush1.msra.mxu0 0.0
      %1250 = vmatprep.subr.mxu0 0.0
      %1251 = vmatpush1.msra.mxu0 0.0
      %1252 = vmatprep.subr.mxu0 0.0
      %1253 = vmatpush1.msra.mxu0 0.0
      %1254 = vmatprep.subr.mxu0 0.0
      %1255 = vmatpush1.msra.mxu0 0.0
      %1256 = vmatprep.subr.mxu0 0.0
      %1257 = vmatpush1.msra.mxu0 0.0
      %1258 = vmatprep.subr.mxu0 0.0
      %1259 = vmatpush1.msra.mxu0 0.0
      %1260 = vmatprep.subr.mxu0 0.0
      %1261 = vmatpush1.msra.mxu0 0.0
      %1262 = vmatprep.subr.mxu0 0.0
      %1263 = vmatpush1.msra.mxu0 0.0
      %1264 = vmatprep.subr.mxu0 0.0
      %1265 = vmatpush1.msra.mxu0 0.0
      %1266 = vmatprep.subr.mxu0 0.0
      %1267 = vmatpush1.msra.mxu0 0.0
      %1268 = vmatprep.subr.mxu0 0.0
      %1269 = vmatpush1.msra.mxu0 0.0
      %1270 = vmatprep.subr.mxu0 0.0
      %1271 = vmatpush1.msra.mxu0 0.0
      %1272 = vmatprep.subr.mxu0 0.0
      %1273 = vmatpush1.msra.mxu0 0.0
      %1274 = vmatprep.subr.mxu0 0.0
      %1275 = vmatpush1.msra.mxu0 0.0
      %1276 = vmatprep.subr.mxu0 0.0
      %1277 = vmatpush1.msra.mxu0 0.0
      %1278 = vmatprep.subr.mxu0 0.0
      %1279 = vmatpush1.msra.mxu0 0.0
      %1280 = vmatprep.subr.mxu0 0.0
      %1281 = vmatpush1.msra.mxu0 0.0
      %1282 = vmatprep.subr.mxu0 0.0
      %1283 = vmatpush1.msra.mxu0 0.0
      %1284 = vmatprep.subr.mxu0 0.0
      %1285 = vmatpush1.msra.mxu0 0.0
      %1286 = vmatprep.subr.mxu0 0.0
      %1287 = vmatpush1.msra.mxu0 0.0
      %1288 = vmatprep.subr.mxu0 0.0
      %1289 = vmatpush1.msra.mxu0 0.0
      %1290 = vmatprep.mubr.f32.mxu0 0.0
      %1291 = vmatmul.mubr.f32.gmra.mrb[0].mxu0 %v1218
      %v1292 = vpop.f32.mrb[0].mxu0
      %v1293 = vadd.f32 0.0, %v1292
      %v1294 = vpop.f32.mrb[0].mxu0
      %v1295 = vadd.f32 0.0, %v1294
      %1296 = vdwg.mxu0
      %v1297 = vadd.f32 %v1208, %v1293
      %v1298 = vadd.f32 %v1209, %v1295
      %v1299 = vld [vmem:[%s4] sm:$0xf]
      %1301 = vset.pattern.permute.xlu0 0
      %1302 = vperm.xlu0 %1301, %v1299
      %v1303 = vpop.permute.xlu0 %1302
      %v1305 = vadd.f32 %v1297, %v1303
      %v1306 = vadd.f32 %v1298, %v1303
      %vm1307 = vcmp.ge.f32.partialorder %v1305, 0.0
      %vm1308 = vcmp.ge.f32.partialorder %v1306, 0.0
      %v1309 = vmul.f32 %v1305, 0.2
      %v1310 = vmul.f32 %v1306, 0.2
      %v1311 = vsel %vm1307, %v1305, %v1309
      %v1312 = vsel %vm1308, %v1306, %v1310
      %v1313 = vld [vmem:[%s5] sm:$0xf]
      %1314 = vrot.lane.b32.xlu0 %v1311, 15
      %v1315 = vpop.permute.xlu0 %1314
      %1316 = vrot.lane.b32.xlu0 %v1312, 15
      %v1317 = vpop.permute.xlu0 %1316
      %v1318 = vsel %vm491, %v1315, %v1317
      %v1319 = vsel %vm491, %v1317, %v1315
      %1320 = vrot.lane.b32.xlu0 %v1311, 127
      %v1321 = vpop.permute.xlu0 %1320
      %1322 = vrot.lane.b32.xlu0 %v1312, 127
      %v1323 = vpop.permute.xlu0 %1322
      %v1324 = vsel %vm498, %v1321, %v1323
      %v1325 = vsel %vm498, %v1323, %v1321
      %v1326 = vsel %vm482, %v1319, %v1324
      %v1327 = vsel %vm483, %v1318, %v1325
      %1328 = vrot.lane.b32.xlu0 %v1311, 113
      %v1329 = vpop.permute.xlu0 %1328
      %1330 = vrot.lane.b32.xlu0 %v1312, 113
      %v1331 = vpop.permute.xlu0 %1330
      %v1332 = vsel %vm509, %v1329, %v1331
      %v1333 = vsel %vm509, %v1331, %v1329
      %1334 = vrot.lane.b32.xlu0 %v1311, 1
      %v1335 = vpop.permute.xlu0 %1334
      %1336 = vrot.lane.b32.xlu0 %v1312, 1
      %v1337 = vpop.permute.xlu0 %1336
      %v1338 = vsel %vm516, %v1335, %v1337
      %v1339 = vsel %vm516, %v1337, %v1335
      %v1340 = vsel %vm503, %v1332, %v1339
      %v1341 = vsel %vm504, %v1333, %v1338
      %1342 = vrot.lane.b32.xlu0 %v1340, 16
      %v1343 = vpop.permute.xlu0 %1342
      %1344 = vrot.lane.b32.xlu0 %v1341, 16
      %v1345 = vpop.permute.xlu0 %1344
      %v1346 = vsel %vm525, %v1343, %v1345
      %v1347 = vsel %vm525, %v1345, %v1343
      %1348 = vrot.lane.b32.xlu0 %v1311, 16
      %v1349 = vpop.permute.xlu0 %1348
      %1350 = vrot.lane.b32.xlu0 %v1312, 16
      %v1351 = vpop.permute.xlu0 %1350
      %v1352 = vsel %vm525, %v1349, %v1351
      %v1353 = vsel %vm525, %v1351, %v1349
      %1355 = vrot.lane.b32.xlu0 %v1313, 124
      %v1356 = vpop.permute.xlu0 %1355
      %v1357 = vsel %vm343, %v1356, 0
      %v1360 = vsel %vm347, %v1353, 0
      %v1363 = vsel %vm347, %v1352, 0
      %1365 = vmatprep.subr.mxu0 %v1363
      %1366 = vmatpush1.msra.mxu0 %v1360
      %1367 = vmatprep.subr.mxu0 0.0
      %1368 = vmatpush1.msra.mxu0 0.0
      %1369 = vmatprep.subr.mxu0 0.0
      %1370 = vmatpush1.msra.mxu0 0.0
      %1371 = vmatprep.subr.mxu0 0.0
      %1372 = vmatpush1.msra.mxu0 0.0
      %1373 = vmatprep.subr.mxu0 0.0
      %1374 = vmatpush1.msra.mxu0 0.0
      %1375 = vmatprep.subr.mxu0 0.0
      %1376 = vmatpush1.msra.mxu0 0.0
      %1377 = vmatprep.subr.mxu0 0.0
      %1378 = vmatpush1.msra.mxu0 0.0
      %1379 = vmatprep.subr.mxu0 0.0
      %1380 = vmatpush1.msra.mxu0 0.0
      %1381 = vmatprep.subr.mxu0 0.0
      %1382 = vmatpush1.msra.mxu0 0.0
      %1383 = vmatprep.subr.mxu0 0.0
      %1384 = vmatpush1.msra.mxu0 0.0
      %1385 = vmatprep.subr.mxu0 0.0
      %1386 = vmatpush1.msra.mxu0 0.0
      %1387 = vmatprep.subr.mxu0 0.0
      %1388 = vmatpush1.msra.mxu0 0.0
      %1389 = vmatprep.subr.mxu0 0.0
      %1390 = vmatpush1.msra.mxu0 0.0
      %1391 = vmatprep.subr.mxu0 0.0
      %1392 = vmatpush1.msra.mxu0 0.0
      %1393 = vmatprep.subr.mxu0 0.0
      %1394 = vmatpush1.msra.mxu0 0.0
      %1395 = vmatprep.subr.mxu0 0.0
      %1396 = vmatpush1.msra.mxu0 0.0
      %1397 = vmatprep.subr.mxu0 0.0
      %1398 = vmatpush1.msra.mxu0 0.0
      %1399 = vmatprep.subr.mxu0 0.0
      %1400 = vmatpush1.msra.mxu0 0.0
      %1401 = vmatprep.subr.mxu0 0.0
      %1402 = vmatpush1.msra.mxu0 0.0
      %1403 = vmatprep.subr.mxu0 0.0
      %1404 = vmatpush1.msra.mxu0 0.0
      %1405 = vmatprep.subr.mxu0 0.0
      %1406 = vmatpush1.msra.mxu0 0.0
      %1407 = vmatprep.subr.mxu0 0.0
      %1408 = vmatpush1.msra.mxu0 0.0
      %1409 = vmatprep.subr.mxu0 0.0
      %1410 = vmatpush1.msra.mxu0 0.0
      %1411 = vmatprep.subr.mxu0 0.0
      %1412 = vmatpush1.msra.mxu0 0.0
      %1413 = vmatprep.subr.mxu0 0.0
      %1414 = vmatpush1.msra.mxu0 0.0
      %1415 = vmatprep.subr.mxu0 0.0
      %1416 = vmatpush1.msra.mxu0 0.0
      %1417 = vmatprep.subr.mxu0 0.0
      %1418 = vmatpush1.msra.mxu0 0.0
      %1419 = vmatprep.subr.mxu0 0.0
      %1420 = vmatpush1.msra.mxu0 0.0
      %1421 = vmatprep.subr.mxu0 0.0
      %1422 = vmatpush1.msra.mxu0 0.0
      %1423 = vmatprep.subr.mxu0 0.0
      %1424 = vmatpush1.msra.mxu0 0.0
      %1425 = vmatprep.subr.mxu0 0.0
      %1426 = vmatpush1.msra.mxu0 0.0
      %1427 = vmatprep.subr.mxu0 0.0
      %1428 = vmatpush1.msra.mxu0 0.0
      %1429 = vmatprep.mubr.f32.mxu0 0.0
      %1430 = vmatmul.mubr.f32.gmra.mrb[0].mxu0 %v1357
      %v1431 = vpop.f32.mrb[0].mxu0
      %v1432 = vadd.f32 0.0, %v1431
      %v1433 = vpop.f32.mrb[0].mxu0
      %v1434 = vadd.f32 0.0, %v1433
      %1435 = vdwg.mxu0
      %v1436 = vsel %vm343, %v1313, 0
      %v1439 = vsel %vm347, %v1347, 0
      %v1442 = vsel %vm347, %v1346, 0
      %1444 = vmatprep.subr.mxu0 %v1442
      %1445 = vmatpush1.msra.mxu0 %v1439
      %1446 = vmatprep.subr.mxu0 0.0
      %1447 = vmatpush1.msra.mxu0 0.0
      %1448 = vmatprep.subr.mxu0 0.0
      %1449 = vmatpush1.msra.mxu0 0.0
      %1450 = vmatprep.subr.mxu0 0.0
      %1451 = vmatpush1.msra.mxu0 0.0
      %1452 = vmatprep.subr.mxu0 0.0
      %1453 = vmatpush1.msra.mxu0 0.0
      %1454 = vmatprep.subr.mxu0 0.0
      %1455 = vmatpush1.msra.mxu0 0.0
      %1456 = vmatprep.subr.mxu0 0.0
      %1457 = vmatpush1.msra.mxu0 0.0
      %1458 = vmatprep.subr.mxu0 0.0
      %1459 = vmatpush1.msra.mxu0 0.0
      %1460 = vmatprep.subr.mxu0 0.0
      %1461 = vmatpush1.msra.mxu0 0.0
      %1462 = vmatprep.subr.mxu0 0.0
      %1463 = vmatpush1.msra.mxu0 0.0
      %1464 = vmatprep.subr.mxu0 0.0
      %1465 = vmatpush1.msra.mxu0 0.0
      %1466 = vmatprep.subr.mxu0 0.0
      %1467 = vmatpush1.msra.mxu0 0.0
      %1468 = vmatprep.subr.mxu0 0.0
      %1469 = vmatpush1.msra.mxu0 0.0
      %1470 = vmatprep.subr.mxu0 0.0
      %1471 = vmatpush1.msra.mxu0 0.0
      %1472 = vmatprep.subr.mxu0 0.0
      %1473 = vmatpush1.msra.mxu0 0.0
      %1474 = vmatprep.subr.mxu0 0.0
      %1475 = vmatpush1.msra.mxu0 0.0
      %1476 = vmatprep.subr.mxu0 0.0
      %1477 = vmatpush1.msra.mxu0 0.0
      %1478 = vmatprep.subr.mxu0 0.0
      %1479 = vmatpush1.msra.mxu0 0.0
      %1480 = vmatprep.subr.mxu0 0.0
      %1481 = vmatpush1.msra.mxu0 0.0
      %1482 = vmatprep.subr.mxu0 0.0
      %1483 = vmatpush1.msra.mxu0 0.0
      %1484 = vmatprep.subr.mxu0 0.0
      %1485 = vmatpush1.msra.mxu0 0.0
      %1486 = vmatprep.subr.mxu0 0.0
      %1487 = vmatpush1.msra.mxu0 0.0
      %1488 = vmatprep.subr.mxu0 0.0
      %1489 = vmatpush1.msra.mxu0 0.0
      %1490 = vmatprep.subr.mxu0 0.0
      %1491 = vmatpush1.msra.mxu0 0.0
      %1492 = vmatprep.subr.mxu0 0.0
      %1493 = vmatpush1.msra.mxu0 0.0
      %1494 = vmatprep.subr.mxu0 0.0
      %1495 = vmatpush1.msra.mxu0 0.0
      %1496 = vmatprep.subr.mxu0 0.0
      %1497 = vmatpush1.msra.mxu0 0.0
      %1498 = vmatprep.subr.mxu0 0.0
      %1499 = vmatpush1.msra.mxu0 0.0
      %1500 = vmatprep.subr.mxu0 0.0
      %1501 = vmatpush1.msra.mxu0 0.0
      %1502 = vmatprep.subr.mxu0 0.0
      %1503 = vmatpush1.msra.mxu0 0.0
      %1504 = vmatprep.subr.mxu0 0.0
      %1505 = vmatpush1.msra.mxu0 0.0
      %1506 = vmatprep.subr.mxu0 0.0
      %1507 = vmatpush1.msra.mxu0 0.0
      %1508 = vmatprep.mubr.f32.mxu0 0.0
      %1509 = vmatmul.mubr.f32.gmra.mrb[0].mxu0 %v1436
      %v1510 = vpop.f32.mrb[0].mxu0
      %v1511 = vadd.f32 %v1432, %v1510
      %v1512 = vpop.f32.mrb[0].mxu0
      %v1513 = vadd.f32 %v1434, %v1512
      %1514 = vdwg.mxu0
      %1515 = vrot.lane.b32.xlu0 %v1326, 16
      %v1516 = vpop.permute.xlu0 %1515
      %1517 = vrot.lane.b32.xlu0 %v1327, 16
      %v1518 = vpop.permute.xlu0 %1517
      %v1519 = vsel %vm525, %v1516, %v1518
      %v1520 = vsel %vm525, %v1518, %v1516
      %1521 = vrot.lane.b32.xlu0 %v1313, 120
      %v1522 = vpop.permute.xlu0 %1521
      %v1523 = vsel %vm343, %v1522, 0
      %v1526 = vsel %vm347, %v1520, 0
      %v1529 = vsel %vm347, %v1519, 0
      %1531 = vmatprep.subr.mxu0 %v1529
      %1532 = vmatpush1.msra.mxu0 %v1526
      %1533 = vmatprep.subr.mxu0 0.0
      %1534 = vmatpush1.msra.mxu0 0.0
      %1535 = vmatprep.subr.mxu0 0.0
      %1536 = vmatpush1.msra.mxu0 0.0
      %1537 = vmatprep.subr.mxu0 0.0
      %1538 = vmatpush1.msra.mxu0 0.0
      %1539 = vmatprep.subr.mxu0 0.0
      %1540 = vmatpush1.msra.mxu0 0.0
      %1541 = vmatprep.subr.mxu0 0.0
      %1542 = vmatpush1.msra.mxu0 0.0
      %1543 = vmatprep.subr.mxu0 0.0
      %1544 = vmatpush1.msra.mxu0 0.0
      %1545 = vmatprep.subr.mxu0 0.0
      %1546 = vmatpush1.msra.mxu0 0.0
      %1547 = vmatprep.subr.mxu0 0.0
      %1548 = vmatpush1.msra.mxu0 0.0
      %1549 = vmatprep.subr.mxu0 0.0
      %1550 = vmatpush1.msra.mxu0 0.0
      %1551 = vmatprep.subr.mxu0 0.0
      %1552 = vmatpush1.msra.mxu0 0.0
      %1553 = vmatprep.subr.mxu0 0.0
      %1554 = vmatpush1.msra.mxu0 0.0
      %1555 = vmatprep.subr.mxu0 0.0
      %1556 = vmatpush1.msra.mxu0 0.0
      %1557 = vmatprep.subr.mxu0 0.0
      %1558 = vmatpush1.msra.mxu0 0.0
      %1559 = vmatprep.subr.mxu0 0.0
      %1560 = vmatpush1.msra.mxu0 0.0
      %1561 = vmatprep.subr.mxu0 0.0
      %1562 = vmatpush1.msra.mxu0 0.0
      %1563 = vmatprep.subr.mxu0 0.0
      %1564 = vmatpush1.msra.mxu0 0.0
      %1565 = vmatprep.subr.mxu0 0.0
      %1566 = vmatpush1.msra.mxu0 0.0
      %1567 = vmatprep.subr.mxu0 0.0
      %1568 = vmatpush1.msra.mxu0 0.0
      %1569 = vmatprep.subr.mxu0 0.0
      %1570 = vmatpush1.msra.mxu0 0.0
      %1571 = vmatprep.subr.mxu0 0.0
      %1572 = vmatpush1.msra.mxu0 0.0
      %1573 = vmatprep.subr.mxu0 0.0
      %1574 = vmatpush1.msra.mxu0 0.0
      %1575 = vmatprep.subr.mxu0 0.0
      %1576 = vmatpush1.msra.mxu0 0.0
      %1577 = vmatprep.subr.mxu0 0.0
      %1578 = vmatpush1.msra.mxu0 0.0
      %1579 = vmatprep.subr.mxu0 0.0
      %1580 = vmatpush1.msra.mxu0 0.0
      %1581 = vmatprep.subr.mxu0 0.0
      %1582 = vmatpush1.msra.mxu0 0.0
      %1583 = vmatprep.subr.mxu0 0.0
      %1584 = vmatpush1.msra.mxu0 0.0
      %1585 = vmatprep.subr.mxu0 0.0
      %1586 = vmatpush1.msra.mxu0 0.0
      %1587 = vmatprep.subr.mxu0 0.0
      %1588 = vmatpush1.msra.mxu0 0.0
      %1589 = vmatprep.subr.mxu0 0.0
      %1590 = vmatpush1.msra.mxu0 0.0
      %1591 = vmatprep.subr.mxu0 0.0
      %1592 = vmatpush1.msra.mxu0 0.0
      %1593 = vmatprep.subr.mxu0 0.0
      %1594 = vmatpush1.msra.mxu0 0.0
      %1595 = vmatprep.mubr.f32.mxu0 0.0
      %1596 = vmatmul.mubr.f32.gmra.mrb[0].mxu0 %v1523
      %v1597 = vpop.f32.mrb[0].mxu0
      %v1598 = vadd.f32 0.0, %v1597
      %v1599 = vpop.f32.mrb[0].mxu0
      %v1600 = vadd.f32 0.0, %v1599
      %1601 = vdwg.mxu0
      %v1602 = vadd.f32 %v1511, %v1598
      %v1603 = vadd.f32 %v1513, %v1600
      %1604 = vrot.lane.b32.xlu0 %v1313, 116
      %v1605 = vpop.permute.xlu0 %1604
      %v1606 = vsel %vm343, %v1605, 0
      %v1609 = vsel %vm347, %v1340, 0
      %v1612 = vsel %vm347, %v1341, 0
      %1614 = vmatprep.subr.mxu0 %v1612
      %1615 = vmatpush1.msra.mxu0 %v1609
      %1616 = vmatprep.subr.mxu0 0.0
      %1617 = vmatpush1.msra.mxu0 0.0
      %1618 = vmatprep.subr.mxu0 0.0
      %1619 = vmatpush1.msra.mxu0 0.0
      %1620 = vmatprep.subr.mxu0 0.0
      %1621 = vmatpush1.msra.mxu0 0.0
      %1622 = vmatprep.subr.mxu0 0.0
      %1623 = vmatpush1.msra.mxu0 0.0
      %1624 = vmatprep.subr.mxu0 0.0
      %1625 = vmatpush1.msra.mxu0 0.0
      %1626 = vmatprep.subr.mxu0 0.0
      %1627 = vmatpush1.msra.mxu0 0.0
      %1628 = vmatprep.subr.mxu0 0.0
      %1629 = vmatpush1.msra.mxu0 0.0
      %1630 = vmatprep.subr.mxu0 0.0
      %1631 = vmatpush1.msra.mxu0 0.0
      %1632 = vmatprep.subr.mxu0 0.0
      %1633 = vmatpush1.msra.mxu0 0.0
      %1634 = vmatprep.subr.mxu0 0.0
      %1635 = vmatpush1.msra.mxu0 0.0
      %1636 = vmatprep.subr.mxu0 0.0
      %1637 = vmatpush1.msra.mxu0 0.0
      %1638 = vmatprep.subr.mxu0 0.0
      %1639 = vmatpush1.msra.mxu0 0.0
      %1640 = vmatprep.subr.mxu0 0.0
      %1641 = vmatpush1.msra.mxu0 0.0
      %1642 = vmatprep.subr.mxu0 0.0
      %1643 = vmatpush1.msra.mxu0 0.0
      %1644 = vmatprep.subr.mxu0 0.0
      %1645 = vmatpush1.msra.mxu0 0.0
      %1646 = vmatprep.subr.mxu0 0.0
      %1647 = vmatpush1.msra.mxu0 0.0
      %1648 = vmatprep.subr.mxu0 0.0
      %1649 = vmatpush1.msra.mxu0 0.0
      %1650 = vmatprep.subr.mxu0 0.0
      %1651 = vmatpush1.msra.mxu0 0.0
      %1652 = vmatprep.subr.mxu0 0.0
      %1653 = vmatpush1.msra.mxu0 0.0
      %1654 = vmatprep.subr.mxu0 0.0
      %1655 = vmatpush1.msra.mxu0 0.0
      %1656 = vmatprep.subr.mxu0 0.0
      %1657 = vmatpush1.msra.mxu0 0.0
      %1658 = vmatprep.subr.mxu0 0.0
      %1659 = vmatpush1.msra.mxu0 0.0
      %1660 = vmatprep.subr.mxu0 0.0
      %1661 = vmatpush1.msra.mxu0 0.0
      %1662 = vmatprep.subr.mxu0 0.0
      %1663 = vmatpush1.msra.mxu0 0.0
      %1664 = vmatprep.subr.mxu0 0.0
      %1665 = vmatpush1.msra.mxu0 0.0
      %1666 = vmatprep.subr.mxu0 0.0
      %1667 = vmatpush1.msra.mxu0 0.0
      %1668 = vmatprep.subr.mxu0 0.0
      %1669 = vmatpush1.msra.mxu0 0.0
      %1670 = vmatprep.subr.mxu0 0.0
      %1671 = vmatpush1.msra.mxu0 0.0
      %1672 = vmatprep.subr.mxu0 0.0
      %1673 = vmatpush1.msra.mxu0 0.0
      %1674 = vmatprep.subr.mxu0 0.0
      %1675 = vmatpush1.msra.mxu0 0.0
      %1676 = vmatprep.subr.mxu0 0.0
      %1677 = vmatpush1.msra.mxu0 0.0
      %1678 = vmatprep.mubr.f32.mxu0 0.0
      %1679 = vmatmul.mubr.f32.gmra.mrb[0].mxu0 %v1606
      %v1680 = vpop.f32.mrb[0].mxu0
      %v1681 = vadd.f32 0.0, %v1680
      %v1682 = vpop.f32.mrb[0].mxu0
      %v1683 = vadd.f32 0.0, %v1682
      %1684 = vdwg.mxu0
      %v1685 = vadd.f32 %v1602, %v1681
      %v1686 = vadd.f32 %v1603, %v1683
      %1687 = vrot.lane.b32.xlu0 %v1313, 112
      %v1688 = vpop.permute.xlu0 %1687
      %v1689 = vsel %vm343, %v1688, 0
      %v1692 = vsel %vm347, %v1311, 0
      %v1695 = vsel %vm347, %v1312, 0
      %1697 = vmatprep.subr.mxu0 %v1695
      %1698 = vmatpush1.msra.mxu0 %v1692
      %1699 = vmatprep.subr.mxu0 0.0
      %1700 = vmatpush1.msra.mxu0 0.0
      %1701 = vmatprep.subr.mxu0 0.0
      %1702 = vmatpush1.msra.mxu0 0.0
      %1703 = vmatprep.subr.mxu0 0.0
      %1704 = vmatpush1.msra.mxu0 0.0
      %1705 = vmatprep.subr.mxu0 0.0
      %1706 = vmatpush1.msra.mxu0 0.0
      %1707 = vmatprep.subr.mxu0 0.0
      %1708 = vmatpush1.msra.mxu0 0.0
      %1709 = vmatprep.subr.mxu0 0.0
      %1710 = vmatpush1.msra.mxu0 0.0
      %1711 = vmatprep.subr.mxu0 0.0
      %1712 = vmatpush1.msra.mxu0 0.0
      %1713 = vmatprep.subr.mxu0 0.0
      %1714 = vmatpush1.msra.mxu0 0.0
      %1715 = vmatprep.subr.mxu0 0.0
      %1716 = vmatpush1.msra.mxu0 0.0
      %1717 = vmatprep.subr.mxu0 0.0
      %1718 = vmatpush1.msra.mxu0 0.0
      %1719 = vmatprep.subr.mxu0 0.0
      %1720 = vmatpush1.msra.mxu0 0.0
      %1721 = vmatprep.subr.mxu0 0.0
      %1722 = vmatpush1.msra.mxu0 0.0
      %1723 = vmatprep.subr.mxu0 0.0
      %1724 = vmatpush1.msra.mxu0 0.0
      %1725 = vmatprep.subr.mxu0 0.0
      %1726 = vmatpush1.msra.mxu0 0.0
      %1727 = vmatprep.subr.mxu0 0.0
      %1728 = vmatpush1.msra.mxu0 0.0
      %1729 = vmatprep.subr.mxu0 0.0
      %1730 = vmatpush1.msra.mxu0 0.0
      %1731 = vmatprep.subr.mxu0 0.0
      %1732 = vmatpush1.msra.mxu0 0.0
      %1733 = vmatprep.subr.mxu0 0.0
      %1734 = vmatpush1.msra.mxu0 0.0
      %1735 = vmatprep.subr.mxu0 0.0
      %1736 = vmatpush1.msra.mxu0 0.0
      %1737 = vmatprep.subr.mxu0 0.0
      %1738 = vmatpush1.msra.mxu0 0.0
      %1739 = vmatprep.subr.mxu0 0.0
      %1740 = vmatpush1.msra.mxu0 0.0
      %1741 = vmatprep.subr.mxu0 0.0
      %1742 = vmatpush1.msra.mxu0 0.0
      %1743 = vmatprep.subr.mxu0 0.0
      %1744 = vmatpush1.msra.mxu0 0.0
      %1745 = vmatprep.subr.mxu0 0.0
      %1746 = vmatpush1.msra.mxu0 0.0
      %1747 = vmatprep.subr.mxu0 0.0
      %1748 = vmatpush1.msra.mxu0 0.0
      %1749 = vmatprep.subr.mxu0 0.0
      %1750 = vmatpush1.msra.mxu0 0.0
      %1751 = vmatprep.subr.mxu0 0.0
      %1752 = vmatpush1.msra.mxu0 0.0
      %1753 = vmatprep.subr.mxu0 0.0
      %1754 = vmatpush1.msra.mxu0 0.0
      %1755 = vmatprep.subr.mxu0 0.0
      %1756 = vmatpush1.msra.mxu0 0.0
      %1757 = vmatprep.subr.mxu0 0.0
      %1758 = vmatpush1.msra.mxu0 0.0
      %1759 = vmatprep.subr.mxu0 0.0
      %1760 = vmatpush1.msra.mxu0 0.0
      %1761 = vmatprep.mubr.f32.mxu0 0.0
      %1762 = vmatmul.mubr.f32.gmra.mrb[0].mxu0 %v1689
      %v1763 = vpop.f32.mrb[0].mxu0
      %v1764 = vadd.f32 0.0, %v1763
      %v1765 = vpop.f32.mrb[0].mxu0
      %v1766 = vadd.f32 0.0, %v1765
      %1767 = vdwg.mxu0
      %v1768 = vadd.f32 %v1685, %v1764
      %v1769 = vadd.f32 %v1686, %v1766
      %1770 = vrot.lane.b32.xlu0 %v1313, 108
      %v1771 = vpop.permute.xlu0 %1770
      %v1772 = vsel %vm343, %v1771, 0
      %v1775 = vsel %vm347, %v1326, 0
      %v1778 = vsel %vm347, %v1327, 0
      %1780 = vmatprep.subr.mxu0 %v1778
      %1781 = vmatpush1.msra.mxu0 %v1775
      %1782 = vmatprep.subr.mxu0 0.0
      %1783 = vmatpush1.msra.mxu0 0.0
      %1784 = vmatprep.subr.mxu0 0.0
      %1785 = vmatpush1.msra.mxu0 0.0
      %1786 = vmatprep.subr.mxu0 0.0
      %1787 = vmatpush1.msra.mxu0 0.0
      %1788 = vmatprep.subr.mxu0 0.0
      %1789 = vmatpush1.msra.mxu0 0.0
      %1790 = vmatprep.subr.mxu0 0.0
      %1791 = vmatpush1.msra.mxu0 0.0
      %1792 = vmatprep.subr.mxu0 0.0
      %1793 = vmatpush1.msra.mxu0 0.0
      %1794 = vmatprep.subr.mxu0 0.0
      %1795 = vmatpush1.msra.mxu0 0.0
      %1796 = vmatprep.subr.mxu0 0.0
      %1797 = vmatpush1.msra.mxu0 0.0
      %1798 = vmatprep.subr.mxu0 0.0
      %1799 = vmatpush1.msra.mxu0 0.0
      %1800 = vmatprep.subr.mxu0 0.0
      %1801 = vmatpush1.msra.mxu0 0.0
      %1802 = vmatprep.subr.mxu0 0.0
      %1803 = vmatpush1.msra.mxu0 0.0
      %1804 = vmatprep.subr.mxu0 0.0
      %1805 = vmatpush1.msra.mxu0 0.0
      %1806 = vmatprep.subr.mxu0 0.0
      %1807 = vmatpush1.msra.mxu0 0.0
      %1808 = vmatprep.subr.mxu0 0.0
      %1809 = vmatpush1.msra.mxu0 0.0
      %1810 = vmatprep.subr.mxu0 0.0
      %1811 = vmatpush1.msra.mxu0 0.0
      %1812 = vmatprep.subr.mxu0 0.0
      %1813 = vmatpush1.msra.mxu0 0.0
      %1814 = vmatprep.subr.mxu0 0.0
      %1815 = vmatpush1.msra.mxu0 0.0
      %1816 = vmatprep.subr.mxu0 0.0
      %1817 = vmatpush1.msra.mxu0 0.0
      %1818 = vmatprep.subr.mxu0 0.0
      %1819 = vmatpush1.msra.mxu0 0.0
      %1820 = vmatprep.subr.mxu0 0.0
      %1821 = vmatpush1.msra.mxu0 0.0
      %1822 = vmatprep.subr.mxu0 0.0
      %1823 = vmatpush1.msra.mxu0 0.0
      %1824 = vmatprep.subr.mxu0 0.0
      %1825 = vmatpush1.msra.mxu0 0.0
      %1826 = vmatprep.subr.mxu0 0.0
      %1827 = vmatpush1.msra.mxu0 0.0
      %1828 = vmatprep.subr.mxu0 0.0
      %1829 = vmatpush1.msra.mxu0 0.0
      %1830 = vmatprep.subr.mxu0 0.0
      %1831 = vmatpush1.msra.mxu0 0.0
      %1832 = vmatprep.subr.mxu0 0.0
      %1833 = vmatpush1.msra.mxu0 0.0
      %1834 = vmatprep.subr.mxu0 0.0
      %1835 = vmatpush1.msra.mxu0 0.0
      %1836 = vmatprep.subr.mxu0 0.0
      %1837 = vmatpush1.msra.mxu0 0.0
      %1838 = vmatprep.subr.mxu0 0.0
      %1839 = vmatpush1.msra.mxu0 0.0
      %1840 = vmatprep.subr.mxu0 0.0
      %1841 = vmatpush1.msra.mxu0 0.0
      %1842 = vmatprep.subr.mxu0 0.0
      %1843 = vmatpush1.msra.mxu0 0.0
      %1844 = vmatprep.mubr.f32.mxu0 0.0
      %1845 = vmatmul.mubr.f32.gmra.mrb[0].mxu0 %v1772
      %v1846 = vpop.f32.mrb[0].mxu0
      %v1847 = vadd.f32 0.0, %v1846
      %v1848 = vpop.f32.mrb[0].mxu0
      %v1849 = vadd.f32 0.0, %v1848
      %1850 = vdwg.mxu0
      %v1851 = vadd.f32 %v1768, %v1847
      %v1852 = vadd.f32 %v1769, %v1849
      %1853 = vrot.lane.b32.xlu0 %v1340, 112
      %v1854 = vpop.permute.xlu0 %1853
      %1855 = vrot.lane.b32.xlu0 %v1341, 112
      %v1856 = vpop.permute.xlu0 %1855
      %v1857 = vsel %vm1035, %v1854, %v1856
      %v1858 = vsel %vm1035, %v1856, %v1854
      %1859 = vrot.lane.b32.xlu0 %v1313, 104
      %v1860 = vpop.permute.xlu0 %1859
      %v1861 = vsel %vm343, %v1860, 0
      %v1864 = vsel %vm347, %v1857, 0
      %v1867 = vsel %vm347, %v1858, 0
      %1869 = vmatprep.subr.mxu0 %v1867
      %1870 = vmatpush1.msra.mxu0 %v1864
      %1871 = vmatprep.subr.mxu0 0.0
      %1872 = vmatpush1.msra.mxu0 0.0
      %1873 = vmatprep.subr.mxu0 0.0
      %1874 = vmatpush1.msra.mxu0 0.0
      %1875 = vmatprep.subr.mxu0 0.0
      %1876 = vmatpush1.msra.mxu0 0.0
      %1877 = vmatprep.subr.mxu0 0.0
      %1878 = vmatpush1.msra.mxu0 0.0
      %1879 = vmatprep.subr.mxu0 0.0
      %1880 = vmatpush1.msra.mxu0 0.0
      %1881 = vmatprep.subr.mxu0 0.0
      %1882 = vmatpush1.msra.mxu0 0.0
      %1883 = vmatprep.subr.mxu0 0.0
      %1884 = vmatpush1.msra.mxu0 0.0
      %1885 = vmatprep.subr.mxu0 0.0
      %1886 = vmatpush1.msra.mxu0 0.0
      %1887 = vmatprep.subr.mxu0 0.0
      %1888 = vmatpush1.msra.mxu0 0.0
      %1889 = vmatprep.subr.mxu0 0.0
      %1890 = vmatpush1.msra.mxu0 0.0
      %1891 = vmatprep.subr.mxu0 0.0
      %1892 = vmatpush1.msra.mxu0 0.0
      %1893 = vmatprep.subr.mxu0 0.0
      %1894 = vmatpush1.msra.mxu0 0.0
      %1895 = vmatprep.subr.mxu0 0.0
      %1896 = vmatpush1.msra.mxu0 0.0
      %1897 = vmatprep.subr.mxu0 0.0
      %1898 = vmatpush1.msra.mxu0 0.0
      %1899 = vmatprep.subr.mxu0 0.0
      %1900 = vmatpush1.msra.mxu0 0.0
      %1901 = vmatprep.subr.mxu0 0.0
      %1902 = vmatpush1.msra.mxu0 0.0
      %1903 = vmatprep.subr.mxu0 0.0
      %1904 = vmatpush1.msra.mxu0 0.0
      %1905 = vmatprep.subr.mxu0 0.0
      %1906 = vmatpush1.msra.mxu0 0.0
      %1907 = vmatprep.subr.mxu0 0.0
      %1908 = vmatpush1.msra.mxu0 0.0
      %1909 = vmatprep.subr.mxu0 0.0
      %1910 = vmatpush1.msra.mxu0 0.0
      %1911 = vmatprep.subr.mxu0 0.0
      %1912 = vmatpush1.msra.mxu0 0.0
      %1913 = vmatprep.subr.mxu0 0.0
      %1914 = vmatpush1.msra.mxu0 0.0
      %1915 = vmatprep.subr.mxu0 0.0
      %1916 = vmatpush1.msra.mxu0 0.0
      %1917 = vmatprep.subr.mxu0 0.0
      %1918 = vmatpush1.msra.mxu0 0.0
      %1919 = vmatprep.subr.mxu0 0.0
      %1920 = vmatpush1.msra.mxu0 0.0
      %1921 = vmatprep.subr.mxu0 0.0
      %1922 = vmatpush1.msra.mxu0 0.0
      %1923 = vmatprep.subr.mxu0 0.0
      %1924 = vmatpush1.msra.mxu0 0.0
      %1925 = vmatprep.subr.mxu0 0.0
      %1926 = vmatpush1.msra.mxu0 0.0
      %1927 = vmatprep.subr.mxu0 0.0
      %1928 = vmatpush1.msra.mxu0 0.0
      %1929 = vmatprep.subr.mxu0 0.0
      %1930 = vmatpush1.msra.mxu0 0.0
      %1931 = vmatprep.subr.mxu0 0.0
      %1932 = vmatpush1.msra.mxu0 0.0
      %1933 = vmatprep.mubr.f32.mxu0 0.0
      %1934 = vmatmul.mubr.f32.gmra.mrb[0].mxu0 %v1861
      %v1935 = vpop.f32.mrb[0].mxu0
      %v1936 = vadd.f32 0.0, %v1935
      %v1937 = vpop.f32.mrb[0].mxu0
      %v1938 = vadd.f32 0.0, %v1937
      %1939 = vdwg.mxu0
      %v1940 = vadd.f32 %v1851, %v1936
      %v1941 = vadd.f32 %v1852, %v1938
      %1942 = vrot.lane.b32.xlu0 %v1311, 112
      %v1943 = vpop.permute.xlu0 %1942
      %1944 = vrot.lane.b32.xlu0 %v1312, 112
      %v1945 = vpop.permute.xlu0 %1944
      %v1946 = vsel %vm1035, %v1943, %v1945
      %v1947 = vsel %vm1035, %v1945, %v1943
      %1948 = vrot.lane.b32.xlu0 %v1313, 100
      %v1949 = vpop.permute.xlu0 %1948
      %v1950 = vsel %vm343, %v1949, 0
      %v1953 = vsel %vm347, %v1946, 0
      %v1956 = vsel %vm347, %v1947, 0
      %1958 = vmatprep.subr.mxu0 %v1956
      %1959 = vmatpush1.msra.mxu0 %v1953
      %1960 = vmatprep.subr.mxu0 0.0
      %1961 = vmatpush1.msra.mxu0 0.0
      %1962 = vmatprep.subr.mxu0 0.0
      %1963 = vmatpush1.msra.mxu0 0.0
      %1964 = vmatprep.subr.mxu0 0.0
      %1965 = vmatpush1.msra.mxu0 0.0
      %1966 = vmatprep.subr.mxu0 0.0
      %1967 = vmatpush1.msra.mxu0 0.0
      %1968 = vmatprep.subr.mxu0 0.0
      %1969 = vmatpush1.msra.mxu0 0.0
      %1970 = vmatprep.subr.mxu0 0.0
      %1971 = vmatpush1.msra.mxu0 0.0
      %1972 = vmatprep.subr.mxu0 0.0
      %1973 = vmatpush1.msra.mxu0 0.0
      %1974 = vmatprep.subr.mxu0 0.0
      %1975 = vmatpush1.msra.mxu0 0.0
      %1976 = vmatprep.subr.mxu0 0.0
      %1977 = vmatpush1.msra.mxu0 0.0
      %1978 = vmatprep.subr.mxu0 0.0
      %1979 = vmatpush1.msra.mxu0 0.0
      %1980 = vmatprep.subr.mxu0 0.0
      %1981 = vmatpush1.msra.mxu0 0.0
      %1982 = vmatprep.subr.mxu0 0.0
      %1983 = vmatpush1.msra.mxu0 0.0
      %1984 = vmatprep.subr.mxu0 0.0
      %1985 = vmatpush1.msra.mxu0 0.0
      %1986 = vmatprep.subr.mxu0 0.0
      %1987 = vmatpush1.msra.mxu0 0.0
      %1988 = vmatprep.subr.mxu0 0.0
      %1989 = vmatpush1.msra.mxu0 0.0
      %1990 = vmatprep.subr.mxu0 0.0
      %1991 = vmatpush1.msra.mxu0 0.0
      %1992 = vmatprep.subr.mxu0 0.0
      %1993 = vmatpush1.msra.mxu0 0.0
      %1994 = vmatprep.subr.mxu0 0.0
      %1995 = vmatpush1.msra.mxu0 0.0
      %1996 = vmatprep.subr.mxu0 0.0
      %1997 = vmatpush1.msra.mxu0 0.0
      %1998 = vmatprep.subr.mxu0 0.0
      %1999 = vmatpush1.msra.mxu0 0.0
      %2000 = vmatprep.subr.mxu0 0.0
      %2001 = vmatpush1.msra.mxu0 0.0
      %2002 = vmatprep.subr.mxu0 0.0
      %2003 = vmatpush1.msra.mxu0 0.0
      %2004 = vmatprep.subr.mxu0 0.0
      %2005 = vmatpush1.msra.mxu0 0.0
      %2006 = vmatprep.subr.mxu0 0.0
      %2007 = vmatpush1.msra.mxu0 0.0
      %2008 = vmatprep.subr.mxu0 0.0
      %2009 = vmatpush1.msra.mxu0 0.0
      %2010 = vmatprep.subr.mxu0 0.0
      %2011 = vmatpush1.msra.mxu0 0.0
      %2012 = vmatprep.subr.mxu0 0.0
      %2013 = vmatpush1.msra.mxu0 0.0
      %2014 = vmatprep.subr.mxu0 0.0
      %2015 = vmatpush1.msra.mxu0 0.0
      %2016 = vmatprep.subr.mxu0 0.0
      %2017 = vmatpush1.msra.mxu0 0.0
      %2018 = vmatprep.subr.mxu0 0.0
      %2019 = vmatpush1.msra.mxu0 0.0
      %2020 = vmatprep.subr.mxu0 0.0
      %2021 = vmatpush1.msra.mxu0 0.0
      %2022 = vmatprep.mubr.f32.mxu0 0.0
      %2023 = vmatmul.mubr.f32.gmra.mrb[0].mxu0 %v1950
      %v2024 = vpop.f32.mrb[0].mxu0
      %v2025 = vadd.f32 0.0, %v2024
      %v2026 = vpop.f32.mrb[0].mxu0
      %v2027 = vadd.f32 0.0, %v2026
      %2028 = vdwg.mxu0
      %v2029 = vadd.f32 %v1940, %v2025
      %v2030 = vadd.f32 %v1941, %v2027
      %2031 = vrot.lane.b32.xlu0 %v1326, 112
      %v2032 = vpop.permute.xlu0 %2031
      %2033 = vrot.lane.b32.xlu0 %v1327, 112
      %v2034 = vpop.permute.xlu0 %2033
      %v2035 = vsel %vm1035, %v2032, %v2034
      %v2036 = vsel %vm1035, %v2034, %v2032
      %2037 = vrot.lane.b32.xlu0 %v1313, 96
      %v2038 = vpop.permute.xlu0 %2037
      %v2039 = vsel %vm343, %v2038, 0
      %v2042 = vsel %vm347, %v2035, 0
      %v2045 = vsel %vm347, %v2036, 0
      %2047 = vmatprep.subr.mxu0 %v2045
      %2048 = vmatpush1.msra.mxu0 %v2042
      %2049 = vmatprep.subr.mxu0 0.0
      %2050 = vmatpush1.msra.mxu0 0.0
      %2051 = vmatprep.subr.mxu0 0.0
      %2052 = vmatpush1.msra.mxu0 0.0
      %2053 = vmatprep.subr.mxu0 0.0
      %2054 = vmatpush1.msra.mxu0 0.0
      %2055 = vmatprep.subr.mxu0 0.0
      %2056 = vmatpush1.msra.mxu0 0.0
      %2057 = vmatprep.subr.mxu0 0.0
      %2058 = vmatpush1.msra.mxu0 0.0
      %2059 = vmatprep.subr.mxu0 0.0
      %2060 = vmatpush1.msra.mxu0 0.0
      %2061 = vmatprep.subr.mxu0 0.0
      %2062 = vmatpush1.msra.mxu0 0.0
      %2063 = vmatprep.subr.mxu0 0.0
      %2064 = vmatpush1.msra.mxu0 0.0
      %2065 = vmatprep.subr.mxu0 0.0
      %2066 = vmatpush1.msra.mxu0 0.0
      %2067 = vmatprep.subr.mxu0 0.0
      %2068 = vmatpush1.msra.mxu0 0.0
      %2069 = vmatprep.subr.mxu0 0.0
      %2070 = vmatpush1.msra.mxu0 0.0
      %2071 = vmatprep.subr.mxu0 0.0
      %2072 = vmatpush1.msra.mxu0 0.0
      %2073 = vmatprep.subr.mxu0 0.0
      %2074 = vmatpush1.msra.mxu0 0.0
      %2075 = vmatprep.subr.mxu0 0.0
      %2076 = vmatpush1.msra.mxu0 0.0
      %2077 = vmatprep.subr.mxu0 0.0
      %2078 = vmatpush1.msra.mxu0 0.0
      %2079 = vmatprep.subr.mxu0 0.0
      %2080 = vmatpush1.msra.mxu0 0.0
      %2081 = vmatprep.subr.mxu0 0.0
      %2082 = vmatpush1.msra.mxu0 0.0
      %2083 = vmatprep.subr.mxu0 0.0
      %2084 = vmatpush1.msra.mxu0 0.0
      %2085 = vmatprep.subr.mxu0 0.0
      %2086 = vmatpush1.msra.mxu0 0.0
      %2087 = vmatprep.subr.mxu0 0.0
      %2088 = vmatpush1.msra.mxu0 0.0
      %2089 = vmatprep.subr.mxu0 0.0
      %2090 = vmatpush1.msra.mxu0 0.0
      %2091 = vmatprep.subr.mxu0 0.0
      %2092 = vmatpush1.msra.mxu0 0.0
      %2093 = vmatprep.subr.mxu0 0.0
      %2094 = vmatpush1.msra.mxu0 0.0
      %2095 = vmatprep.subr.mxu0 0.0
      %2096 = vmatpush1.msra.mxu0 0.0
      %2097 = vmatprep.subr.mxu0 0.0
      %2098 = vmatpush1.msra.mxu0 0.0
      %2099 = vmatprep.subr.mxu0 0.0
      %2100 = vmatpush1.msra.mxu0 0.0
      %2101 = vmatprep.subr.mxu0 0.0
      %2102 = vmatpush1.msra.mxu0 0.0
      %2103 = vmatprep.subr.mxu0 0.0
      %2104 = vmatpush1.msra.mxu0 0.0
      %2105 = vmatprep.subr.mxu0 0.0
      %2106 = vmatpush1.msra.mxu0 0.0
      %2107 = vmatprep.subr.mxu0 0.0
      %2108 = vmatpush1.msra.mxu0 0.0
      %2109 = vmatprep.subr.mxu0 0.0
      %2110 = vmatpush1.msra.mxu0 0.0
      %2111 = vmatprep.mubr.f32.mxu0 0.0
      %2112 = vmatmul.mubr.f32.gmra.mrb[0].mxu0 %v2039
      %v2113 = vpop.f32.mrb[0].mxu0
      %v2114 = vadd.f32 0.0, %v2113
      %v2115 = vpop.f32.mrb[0].mxu0
      %v2116 = vadd.f32 0.0, %v2115
      %2117 = vdwg.mxu0
      %v2118 = vadd.f32 %v2029, %v2114
      %v2119 = vadd.f32 %v2030, %v2116
      %v2120 = vld [vmem:[%s6] sm:$0xf]
      %2122 = vset.pattern.permute.xlu0 0
      %2123 = vperm.xlu0 %2122, %v2120
      %v2124 = vpop.permute.xlu0 %2123
      %v2126 = vadd.f32 %v2118, %v2124
      %v2127 = vadd.f32 %v2119, %v2124
      %v2128 = vadd.f32 %v2126, %v419
      %v2129 = vadd.f32 %v2127, %v421
      %v2132 = vcombine.low %v2128, %v2129
      %2134 = vst [vmem:[%s332] sm:$0xff] %v2132
      %p2135 = scmp.lt.s32.totalorder %s20, 1
      %s2136 = scalar_select %p2135, %s20, 1
      %s2137 = smul.addr %s2136, 2
      %s2138 = smul.addr %s2137, 4
      %s2139 = scalar_lea.vmem %s9, %s2138
      // Predicated region
      $region57: #{res_unit_forward.1} parent=55 // pred_check
        %p2140 = pneg %p232
      $region58: #{res_unit_forward.1} parent=55 // pred_check_branch
        %2142 = sbr.rel (%p2140) target = $region60
      $region59: #{res_unit_forward.1} parent=55 // pred_region
        _
      $region60: #{res_unit_forward.1} parent=55 // pred_fallthru
        _
    $region56: #{res_unit_forward.1} parent=5 // pred_fallthru
      _
    %p2143 = scmp.le.s32.totalorder 2, %s15
    // Predicated region
    $region61: #{res_unit_forward.1} parent=5 // pred_check
      %p2144 = pneg %p2143
    $region62: #{res_unit_forward.1} parent=5 // pred_check_branch
      %2146 = sbr.rel (%p2144) target = $region64
    $region63: #{res_unit_forward.1} parent=5 // pred_region
      %s2147 = ssub.s32 %s15, 2
      // Predicated region
      $region65: #{res_unit_forward.1} parent=63 // pred_check
        %p2148 = pneg %p238
      $region66: #{res_unit_forward.1} parent=63 // pred_check_branch
        %2150 = sbr.rel (%p2148) target = $region68
      $region67: #{res_unit_forward.1} parent=63 // pred_region
        %p2151 = scmp.lt.s32.totalorder %s21, 1
        %s2152 = scalar_select %p2151, %s21, 1
        %s2153 = smul.addr %s2152, 2
        %s2154 = smul.addr %s2153, 4
        %s2155 = scalar_lea.vmem %s9, %s2154
      $region68: #{res_unit_forward.1} parent=63 // pred_fallthru
        _
    $region64: #{res_unit_forward.1} parent=5 // pred_fallthru
      _
  $region6: #{res_unit_forward.1} parent=0 // loop_footer
    %s19 = sadd.s32 1, %s15
  $region7: #{res_unit_forward.1} parent=0 // loop_footer_branch
    %14 = sbr.rel target = $region3
  $region8: #{res_unit_forward.1} parent=0 // loop_exit
    _

</llo_original>
